<compile_context>
chip_gen: v5e
topology: v5e:2x2
jax: 0.10.0
libtpu: 0.0.40
codegen_flags: <defaults>
</compile_context>

<pallas_src>
import functools
import math

import jax
import jax.numpy as jnp
import numpy as np
from jax.experimental import pallas as pl
from jax.experimental.pallas import tpu as pltpu

EPS = 1e-5                      # nn.LayerNorm / TransformerEncoderLayer default eps
COMPUTE_DTYPE = jnp.float32     # set to jnp.bfloat16 at production D for native MXU


def _layernorm(v, g, b):
    mu = jnp.mean(v, axis=-1, keepdims=True)
    var = jnp.mean(jnp.square(v - mu), axis=-1, keepdims=True)
    return (v - mu) * jax.lax.rsqrt(var + EPS) * g + b


def _dot(a, b):
    return jnp.dot(a.astype(COMPUTE_DTYPE), b.astype(COMPUTE_DTYPE),
                   preferred_element_type=jnp.float32)


def _bqk(q, k):  # (Bb, Lq, d) x (Bb, Lk, d) -> (Bb, Lq, Lk)
    return jnp.einsum("bqd,bkd->bqk", q.astype(COMPUTE_DTYPE),
                      k.astype(COMPUTE_DTYPE),
                      preferred_element_type=jnp.float32)


def _bqd(p, v):  # (Bb, Lq, Lk) x (Bb, Lk, d) -> (Bb, Lq, d)
    return jnp.einsum("bqk,bkd->bqd", p.astype(COMPUTE_DTYPE),
                      v.astype(COMPUTE_DTYPE),
                      preferred_element_type=jnp.float32)


# ----------------------------------------------------------------------------
# Pallas kernel: one full cnn_transformer layer, one batch chunk per grid step.
# Rows inside the kernel are batch-major: flat row = b*S + s.
# ----------------------------------------------------------------------------
def cnn_transformer_layer_kernel(
    x_ref,
    conv_w_ref, conv_b_ref, ln1_g_ref, ln1_b_ref,
    inproj_w_ref, inproj_b_ref, outproj_w_ref, outproj_b_ref,
    norm1_g_ref, norm1_b_ref, lin1_w_ref, lin1_b_ref,
    lin2_w_ref, lin2_b_ref, norm2_g_ref, norm2_b_ref,
    deconv_w_ref, deconv_b_ref, ln2_g_ref, ln2_b_ref,
    o_ref, *, K, S, D, H, Bb,
):
    f32 = jnp.float32
    hd = D // H
    Lo = S - K + 1
    scale = 1.0 / math.sqrt(hd)

    x2 = x_ref[...]                          # (Bb*S, D)
    x3 = x2.reshape(Bb, S, D)                # batch-major 3-D view

    # ---- Conv1d (stride 1, valid) + ReLU + LayerNorm ------------------------
    # K taps are per-batch seq windows, lane-concatenated into one MXU matmul.
    taps = [x3[:, k:k + Lo, :] for k in range(K)]
    xt = taps[0] if K == 1 else jnp.concatenate(taps, axis=-1)      # (Bb, Lo, K*D)
    h = _dot(xt.reshape(Bb * Lo, K * D), conv_w_ref[...]) + conv_b_ref[...]
    h = jnp.maximum(h, 0.0)
    h = _layernorm(h, ln1_g_ref[...], ln1_b_ref[...])               # (Bb*Lo, D)

    # ---- TransformerEncoderLayer (post-norm, ReLU FFN, dropout=identity) ----
    qkv = _dot(h, inproj_w_ref[...]) + inproj_b_ref[...]            # (Bb*Lo, 3D)
    q3 = (qkv[:, 0 * D:1 * D] * scale).reshape(Bb, Lo, D)
    k3 = qkv[:, 1 * D:2 * D].reshape(Bb, Lo, D)
    v3 = qkv[:, 2 * D:3 * D].reshape(Bb, Lo, D)

    # Batched per-batch-element attention: no cross-batch work, no mask.
    # (Per-head Python loop kept; each head is a Bb-batched dot_general.)
    ctx_parts = []
    for hh in range(H):
        c0, c1 = hh * hd, (hh + 1) * hd
        sc = _bqk(q3[:, :, c0:c1], k3[:, :, c0:c1])                 # (Bb, Lo, Lo)
        sc = sc - jnp.max(sc, axis=-1, keepdims=True)
        e = jnp.exp(sc)
        p = e * pl.reciprocal(jnp.sum(e, axis=-1, keepdims=True), approx=True)
        ctx_parts.append(_bqd(p, v3[:, :, c0:c1]))                  # (Bb, Lo, hd)
    ctx = ctx_parts[0] if H == 1 else jnp.concatenate(ctx_parts, axis=-1)
    attn = _dot(ctx.reshape(Bb * Lo, D), outproj_w_ref[...]) + outproj_b_ref[...]
    h = _layernorm(h + attn, norm1_g_ref[...], norm1_b_ref[...])

    f = _dot(h, lin1_w_ref[...]) + lin1_b_ref[...]
    f = jnp.maximum(f, 0.0)
    f = _dot(f, lin2_w_ref[...]) + lin2_b_ref[...]
    h = _layernorm(h + f, norm2_g_ref[...], norm2_b_ref[...])       # (Bb*Lo, D)

    # ---- ConvTranspose1d (stride 1, full) + ReLU + LayerNorm ----------------
    # No scratch round trip: zero edges are built in-value, and the K (flipped)
    # taps are accumulated as K matmuls on shifted per-batch windows.
    dw = deconv_w_ref[...]                                          # (K*D, D), tap-flipped
    d = jnp.zeros((Bb * S, D), f32) + deconv_b_ref[...]
    if K == 1:
        d = d + _dot(h, dw)                                         # Lo == S
    else:
        h3 = h.reshape(Bb, Lo, D)
        zpad = jnp.zeros((Bb, K - 1, D), f32)
        hp = jnp.concatenate([zpad, h3, zpad], axis=1)              # (Bb, S+K-1, D)
        for j in range(K):
            win = hp[:, j:j + S, :].reshape(Bb * S, D)
            d = d + _dot(win, dw[j * D:(j + 1) * D, :])
    d = jnp.maximum(d, 0.0)
    d = _layernorm(d, ln2_g_ref[...], ln2_b_ref[...])               # (Bb*S, D)

    # ---- residual add and store ---------------------------------------------
    o_ref[...] = x2 + d


# ----------------------------------------------------------------------------
# Wrapper glue
# ----------------------------------------------------------------------------
_SINGLE_BUFFER_WEIGHTS = None   # resolved (with a safe fallback) on first layer call


def _pick_batch_block(B, S):
    """>=2 grid steps when B > 1 (two v7x TensorCores + DMA/compute overlap),
    capped for VMEM, with the block row count (Bb*S) kept a multiple of 8."""
    if B == 1:
        return 1
    cap = max(1, min(B // 2, 8))
    for cand in range(cap, 0, -1):
        if B % cand == 0 and (cand * S) % 8 == 0:
            return cand
    return B   # single full-batch block (full-array block shape is always legal)


def _weight_spec(shape, single_buffer):
    zero_idx = (0,) * len(shape)
    if single_buffer:
        # Constant-index weights: double-buffering buys nothing, halves VMEM use.
        return pl.BlockSpec(shape, lambda b: zero_idx, pipeline_mode=pl.Buffered(1))
    return pl.BlockSpec(shape, lambda b: zero_idx)


def run_layer(x2d, kparams, *, K, H, S, B, D, Bb):
    global _SINGLE_BUFFER_WEIGHTS
    rows_blk = Bb * S
    param_bytes = sum(int(np.prod(p.shape)) * p.dtype.itemsize for p in kparams)
    est = (2 * param_bytes                     # weights (worst case double-buffered)
           + 4 * rows_blk * D * 4              # in/out blocks, double-buffered
           + 12 * rows_blk * 3 * D * 4         # widest live activation slabs
           + 4 * Bb * S * S * 4)               # attention score block
    # Raise the scoped-VMEM limit explicitly only when the default could bind
    # (v5e default is 16 MiB); leave the compiler default at toy sizes.
    vmem_limit = int(min(max(2 * est, 16 * 2**20), 48 * 2**20)) if est > 12 * 2**20 else None

    kernel = functools.partial(cnn_transformer_layer_kernel,
                               K=K, S=S, D=D, H=H, Bb=Bb)

    def call(single_buffer):
        in_specs = [pl.BlockSpec((rows_blk, D), lambda b: (b, 0))]
        in_specs += [_weight_spec(p.shape, single_buffer) for p in kparams]
        out_spec = pl.BlockSpec((rows_blk, D), lambda b: (b, 0))
        return pl.pallas_call(
            kernel,
            out_shape=jax.ShapeDtypeStruct((B * S, D), jnp.float32),
            grid_spec=pltpu.PrefetchScalarGridSpec(
                num_scalar_prefetch=0,
                grid=(B // Bb,),
                in_specs=in_specs,
                out_specs=out_spec,
            ),
            compiler_params=pltpu.CompilerParams(
                dimension_semantics=("parallel",),
                vmem_limit_bytes=vmem_limit,
            ),
        )(x2d, *kparams)

    if _SINGLE_BUFFER_WEIGHTS is None:
        # Probe single-buffered weight specs once; fall back safely if the
        # pipeline_mode path is unsupported (or numerically off) on this build.
        base = jax.block_until_ready(call(False))
        try:
            buffed = jax.block_until_ready(call(True))
            ok = bool(jnp.allclose(buffed, base, rtol=1e-6, atol=1e-6))
        except Exception:
            ok, buffed = False, None
        _SINGLE_BUFFER_WEIGHTS = ok
        return buffed if ok else base
    return call(_SINGLE_BUFFER_WEIGHTS)


def torch_to_kernel_params(p):
    """Pre-fold PyTorch-layout weights into tap-stacked, matmul-ready layouts."""
    row = lambda a: a.reshape(1, -1).astype(jnp.float32)
    D, _, K = p["conv_w"].shape
    # Conv1d weight (Cout, Cin, K) -> (K*Cin, Cout); tap k occupies rows [k*D,(k+1)*D)
    conv_wf = jnp.transpose(p["conv_w"], (2, 1, 0)).reshape(K * D, D)
    # ConvTranspose1d weight (Cin, Cout, K) -> tap-flipped (K*Cin, Cout)
    deconv_wf = jnp.transpose(p["deconv_w"], (2, 0, 1))[::-1].reshape(K * D, D)
    return [
        conv_wf, row(p["conv_b"]),
        row(p["ln1_g"]), row(p["ln1_b"]),
        p["inproj_w"].T, row(p["inproj_b"]),            # (D, 3D)
        p["outproj_w"].T, row(p["outproj_b"]),          # (D, D)
        row(p["norm1_g"]), row(p["norm1_b"]),
        p["lin1_w"].T, row(p["lin1_b"]),                # (D, 2D)
        p["lin2_w"].T, row(p["lin2_b"]),                # (2D, D)
        row(p["norm2_g"]), row(p["norm2_b"]),
        deconv_wf, row(p["deconv_b"]),
        row(p["ln2_g"]), row(p["ln2_b"]),
    ]


def cnn_transformer_forward(x_sbd, layer_params, nheads):
    S, B, D = x_sbd.shape
    Bb = _pick_batch_block(B, S)
    # ONE layout change for the whole stack (not per layer): (S,B,D) -> batch-major
    # row-stacked (B*S, D).  Each grid step then DMAs one contiguous HBM slab.
    x = jnp.transpose(x_sbd.astype(jnp.float32), (1, 0, 2)).reshape(B * S, D)
    for prm in layer_params:
        K = prm["conv_w"].shape[-1]
        x = run_layer(x, torch_to_kernel_params(prm),
                      K=K, H=nheads, S=S, B=B, D=D, Bb=Bb)
    return jnp.transpose(x.reshape(B, S, D), (1, 0, 2))


# ----------------------------------------------------------------------------
# Deterministic parameter init (PyTorch layouts)
# ----------------------------------------------------------------------------
def init_layer_params(key, D, K):
    ks = jax.random.split(key, 12)
    n = lambda k, shp: jax.random.normal(k, shp, jnp.float32) * 0.1
    ones = jnp.ones((D,), jnp.float32)
    zeros = jnp.zeros((D,), jnp.float32)
    return dict(
        conv_w=n(ks[0], (D, D, K)), conv_b=n(ks[1], (D,)),          # Conv1d (Cout,Cin,K)
        ln1_g=ones, ln1_b=zeros,
        inproj_w=n(ks[2], (3 * D, D)), inproj_b=n(ks[3], (3 * D,)),
        outproj_w=n(ks[4], (D, D)), outproj_b=n(ks[5], (D,)),
        norm1_g=ones, norm1_b=zeros,
        lin1_w=n(ks[6], (2 * D, D)), lin1_b=n(ks[7], (2 * D,)),
        lin2_w=n(ks[8], (D, 2 * D)), lin2_b=n(ks[9], (D,)),
        norm2_g=ones, norm2_b=zeros,
        deconv_w=n(ks[10], (D, D, K)), deconv_b=n(ks[11], (D,)),    # ConvTranspose1d (Cin,Cout,K)
        ln2_g=ones, ln2_b=zeros,
    )


# ----------------------------------------------------------------------------
# Pure-JAX reference (mirrors PyTorch semantics, eval mode)
# ----------------------------------------------------------------------------
def ref_forward(x_sbd, layer_params, H):
    x = jnp.transpose(x_sbd, (1, 0, 2))   # (B, S, D)
    B, S, D = x.shape
    hd = D // H
    for p in layer_params:
        res = x
        K = p["conv_w"].shape[-1]
        Lo = S - K + 1
        h = p["conv_b"][None, None, :]
        for k in range(K):
            h = h + jnp.einsum("bld,ed->ble", x[:, k:k + Lo, :], p["conv_w"][:, :, k])
        h = jax.nn.relu(h)
        h = _layernorm(h, p["ln1_g"], p["ln1_b"])

        qkv = h @ p["inproj_w"].T + p["inproj_b"]
        q, kk, v = jnp.split(qkv, 3, axis=-1)
        heads = lambda t: jnp.transpose(t.reshape(B, Lo, H, hd), (0, 2, 1, 3))
        qh, kh, vh = heads(q), heads(kk), heads(v)
        s = jnp.einsum("bhqd,bhkd->bhqk", qh, kh) * (1.0 / math.sqrt(hd))
        a = jax.nn.softmax(s, axis=-1)
        o = jnp.einsum("bhqk,bhkd->bhqd", a, vh)
        o = jnp.transpose(o, (0, 2, 1, 3)).reshape(B, Lo, D)
        attn = o @ p["outproj_w"].T + p["outproj_b"]
        h = _layernorm(h + attn, p["norm1_g"], p["norm1_b"])
        f = jax.nn.relu(h @ p["lin1_w"].T + p["lin1_b"]) @ p["lin2_w"].T + p["lin2_b"]
        h = _layernorm(h + f, p["norm2_g"], p["norm2_b"])

        hp = jnp.pad(h, ((0, 0), (K - 1, K - 1), (0, 0)))
        d = p["deconv_b"][None, None, :]
        for j in range(K):
            d = d + jnp.einsum("bld,de->ble", hp[:, j:j + S, :],
                               p["deconv_w"][:, :, K - 1 - j])
        d = jax.nn.relu(d)
        d = _layernorm(d, p["ln2_g"], p["ln2_b"])
        x = res + d
    return jnp.transpose(x, (1, 0, 2))


if __name__ == "__main__":
    S, B, D = 8, 2, 32          # seq, batch, input_dimension
    num_layers, nheads = 2, 4   # kernel sizes per layer: 3, 1

    key = jax.random.PRNGKey(0)
    keys = jax.random.split(key, 1 + num_layers)
    x = jax.random.normal(keys[0], (S, B, D), jnp.float32)
    layers = [init_layer_params(keys[1 + i], D, (num_layers - i) * 2 - 1)
              for i in range(num_layers)]

    out = cnn_transformer_forward(x, layers, nheads)
    out = jax.block_until_ready(out)
    assert out.shape == (S, B, D)

    ref = ref_forward(x, layers, nheads)
    np.testing.assert_allclose(np.asarray(out), np.asarray(ref),
                               rtol=5e-3, atol=5e-3)
    print("KERNEL_OK")
</pallas_src>

<mosaic_0001>
module attributes {stable_mosaic.version = 11 : i64} {
  func.func @cnn_transformer_layer_kernel(%arg0: i32, %arg1: memref<8x32xf32, #tpu.memory_space<vmem>>, %arg2: memref<96x32xf32, #tpu.memory_space<vmem>>, %arg3: memref<1x32xf32, #tpu.memory_space<vmem>>, %arg4: memref<1x32xf32, #tpu.memory_space<vmem>>, %arg5: memref<1x32xf32, #tpu.memory_space<vmem>>, %arg6: memref<32x96xf32, #tpu.memory_space<vmem>>, %arg7: memref<1x96xf32, #tpu.memory_space<vmem>>, %arg8: memref<32x32xf32, #tpu.memory_space<vmem>>, %arg9: memref<1x32xf32, #tpu.memory_space<vmem>>, %arg10: memref<1x32xf32, #tpu.memory_space<vmem>>, %arg11: memref<1x32xf32, #tpu.memory_space<vmem>>, %arg12: memref<32x64xf32, #tpu.memory_space<vmem>>, %arg13: memref<1x64xf32, #tpu.memory_space<vmem>>, %arg14: memref<64x32xf32, #tpu.memory_space<vmem>>, %arg15: memref<1x32xf32, #tpu.memory_space<vmem>>, %arg16: memref<1x32xf32, #tpu.memory_space<vmem>>, %arg17: memref<1x32xf32, #tpu.memory_space<vmem>>, %arg18: memref<96x32xf32, #tpu.memory_space<vmem>>, %arg19: memref<1x32xf32, #tpu.memory_space<vmem>>, %arg20: memref<1x32xf32, #tpu.memory_space<vmem>>, %arg21: memref<1x32xf32, #tpu.memory_space<vmem>>, %arg22: memref<8x32xf32, #tpu.memory_space<vmem>>) attributes {dimension_semantics = [#tpu.dimension_semantics<parallel>], iteration_bounds = array<i64: 2>, scalar_prefetch = 0 : i64, scratch_operands = 0 : i64, tpu.core_type = #tpu.core_type<tc>, window_params = [{transform_indices = @transform_0, window_bounds = array<i64: 8, 32>}, {pipeline_mode = #tpu.pipeline_mode<synchronous>, transform_indices = @transform_1, window_bounds = array<i64: 96, 32>}, {pipeline_mode = #tpu.pipeline_mode<synchronous>, transform_indices = @transform_2, window_bounds = array<i64: 1, 32>}, {pipeline_mode = #tpu.pipeline_mode<synchronous>, transform_indices = @transform_3, window_bounds = array<i64: 1, 32>}, {pipeline_mode = #tpu.pipeline_mode<synchronous>, transform_indices = @transform_4, window_bounds = array<i64: 1, 32>}, {pipeline_mode = #tpu.pipeline_mode<synchronous>, transform_indices = @transform_5, window_bounds = array<i64: 32, 96>}, {pipeline_mode = #tpu.pipeline_mode<synchronous>, transform_indices = @transform_6, window_bounds = array<i64: 1, 96>}, {pipeline_mode = #tpu.pipeline_mode<synchronous>, transform_indices = @transform_7, window_bounds = array<i64: 32, 32>}, {pipeline_mode = #tpu.pipeline_mode<synchronous>, transform_indices = @transform_8, window_bounds = array<i64: 1, 32>}, {pipeline_mode = #tpu.pipeline_mode<synchronous>, transform_indices = @transform_9, window_bounds = array<i64: 1, 32>}, {pipeline_mode = #tpu.pipeline_mode<synchronous>, transform_indices = @transform_10, window_bounds = array<i64: 1, 32>}, {pipeline_mode = #tpu.pipeline_mode<synchronous>, transform_indices = @transform_11, window_bounds = array<i64: 32, 64>}, {pipeline_mode = #tpu.pipeline_mode<synchronous>, transform_indices = @transform_12, window_bounds = array<i64: 1, 64>}, {pipeline_mode = #tpu.pipeline_mode<synchronous>, transform_indices = @transform_13, window_bounds = array<i64: 64, 32>}, {pipeline_mode = #tpu.pipeline_mode<synchronous>, transform_indices = @transform_14, window_bounds = array<i64: 1, 32>}, {pipeline_mode = #tpu.pipeline_mode<synchronous>, transform_indices = @transform_15, window_bounds = array<i64: 1, 32>}, {pipeline_mode = #tpu.pipeline_mode<synchronous>, transform_indices = @transform_16, window_bounds = array<i64: 1, 32>}, {pipeline_mode = #tpu.pipeline_mode<synchronous>, transform_indices = @transform_17, window_bounds = array<i64: 96, 32>}, {pipeline_mode = #tpu.pipeline_mode<synchronous>, transform_indices = @transform_18, window_bounds = array<i64: 1, 32>}, {pipeline_mode = #tpu.pipeline_mode<synchronous>, transform_indices = @transform_19, window_bounds = array<i64: 1, 32>}, {pipeline_mode = #tpu.pipeline_mode<synchronous>, transform_indices = @transform_20, window_bounds = array<i64: 1, 32>}, {transform_indices = @transform_21, window_bounds = array<i64: 8, 32>}]} {
    %c0 = arith.constant 0 : index
    %c0_0 = arith.constant 0 : index
    %0 = vector.load %arg1[%c0, %c0_0] : memref<8x32xf32, #tpu.memory_space<vmem>>, vector<8x32xf32>
    %1 = vector.shape_cast %0 : vector<8x32xf32> to vector<1x8x32xf32>
    %2 = vector.extract_strided_slice %1 {offsets = [0, 0, 0], sizes = [1, 6, 32], strides = [1, 1, 1]} : vector<1x8x32xf32> to vector<1x6x32xf32>
    %3 = vector.extract_strided_slice %1 {offsets = [0, 1, 0], sizes = [1, 6, 32], strides = [1, 1, 1]} : vector<1x8x32xf32> to vector<1x6x32xf32>
    %4 = vector.extract_strided_slice %1 {offsets = [0, 2, 0], sizes = [1, 6, 32], strides = [1, 1, 1]} : vector<1x8x32xf32> to vector<1x6x32xf32>
    %5 = tpu.concatenate %2, %3, %4 in 2 : vector<1x6x32xf32>, vector<1x6x32xf32>, vector<1x6x32xf32> -> vector<1x6x96xf32>
    %6 = vector.shape_cast %5 : vector<1x6x96xf32> to vector<6x96xf32>
    %c0_1 = arith.constant 0 : index
    %c0_2 = arith.constant 0 : index
    %7 = vector.load %arg2[%c0_1, %c0_2] : memref<96x32xf32, #tpu.memory_space<vmem>>, vector<96x32xf32>
    %cst = arith.constant dense<0.000000e+00> : vector<6x32xf32>
    %8 = tpu.matmul %6, %7, %cst {dimension_numbers = #tpu.dot_dimension_numbers<[1], [0], [0], [1], [0, 0, 1, 1], [], []>} : vector<6x96xf32>, vector<96x32xf32>, vector<6x32xf32> -> vector<6x32xf32>
    %c0_3 = arith.constant 0 : index
    %c0_4 = arith.constant 0 : index
    %9 = vector.load %arg3[%c0_3, %c0_4] : memref<1x32xf32, #tpu.memory_space<vmem>>, vector<1x32xf32>
    %10 = vector.broadcast %9 : vector<1x32xf32> to vector<6x32xf32>
    %11 = arith.addf %8, %10 : vector<6x32xf32>
    %cst_5 = arith.constant 0.000000e+00 : f32
    %12 = vector.broadcast %cst_5 : f32 to vector<6x32xf32>
    %13 = arith.maximumf %11, %12 : vector<6x32xf32>
    %c0_6 = arith.constant 0 : index
    %c0_7 = arith.constant 0 : index
    %14 = vector.load %arg4[%c0_6, %c0_7] : memref<1x32xf32, #tpu.memory_space<vmem>>, vector<1x32xf32>
    %c0_8 = arith.constant 0 : index
    %c0_9 = arith.constant 0 : index
    %15 = vector.load %arg5[%c0_8, %c0_9] : memref<1x32xf32, #tpu.memory_space<vmem>>, vector<1x32xf32>
    %cst_10 = arith.constant dense<0.000000e+00> : vector<6xf32>
    %16 = vector.multi_reduction <add>, %13, %cst_10 [1] : vector<6x32xf32> to vector<6xf32>
    %17 = vector.shape_cast %16 : vector<6xf32> to vector<6x1xf32>
    %cst_11 = arith.constant 3.200000e+01 : f32
    %18 = vector.broadcast %cst_11 : f32 to vector<6x1xf32>
    %19 = arith.divf %17, %18 : vector<6x1xf32>
    %20 = vector.broadcast %19 : vector<6x1xf32> to vector<6x32xf32>
    %21 = arith.subf %13, %20 : vector<6x32xf32>
    %22 = arith.mulf %21, %21 : vector<6x32xf32>
    %cst_12 = arith.constant dense<0.000000e+00> : vector<6xf32>
    %23 = vector.multi_reduction <add>, %22, %cst_12 [1] : vector<6x32xf32> to vector<6xf32>
    %24 = vector.shape_cast %23 : vector<6xf32> to vector<6x1xf32>
    %cst_13 = arith.constant 3.200000e+01 : f32
    %25 = vector.broadcast %cst_13 : f32 to vector<6x1xf32>
    %26 = arith.divf %24, %25 : vector<6x1xf32>
    %27 = vector.broadcast %19 : vector<6x1xf32> to vector<6x32xf32>
    %28 = arith.subf %13, %27 : vector<6x32xf32>
    %cst_14 = arith.constant 9.99999974E-6 : f32
    %29 = vector.broadcast %cst_14 : f32 to vector<6x1xf32>
    %30 = arith.addf %26, %29 : vector<6x1xf32>
    %31 = math.rsqrt %30 : vector<6x1xf32>
    %32 = vector.broadcast %31 : vector<6x1xf32> to vector<6x32xf32>
    %33 = arith.mulf %28, %32 : vector<6x32xf32>
    %34 = vector.broadcast %14 : vector<1x32xf32> to vector<6x32xf32>
    %35 = arith.mulf %33, %34 : vector<6x32xf32>
    %36 = vector.broadcast %15 : vector<1x32xf32> to vector<6x32xf32>
    %37 = arith.addf %35, %36 : vector<6x32xf32>
    %c0_15 = arith.constant 0 : index
    %c0_16 = arith.constant 0 : index
    %38 = vector.load %arg6[%c0_15, %c0_16] : memref<32x96xf32, #tpu.memory_space<vmem>>, vector<32x96xf32>
    %cst_17 = arith.constant dense<0.000000e+00> : vector<6x96xf32>
    %39 = tpu.matmul %37, %38, %cst_17 {dimension_numbers = #tpu.dot_dimension_numbers<[1], [0], [0], [1], [0, 0, 1, 1], [], []>} : vector<6x32xf32>, vector<32x96xf32>, vector<6x96xf32> -> vector<6x96xf32>
    %c0_18 = arith.constant 0 : index
    %c0_19 = arith.constant 0 : index
    %40 = vector.load %arg7[%c0_18, %c0_19] : memref<1x96xf32, #tpu.memory_space<vmem>>, vector<1x96xf32>
    %41 = vector.broadcast %40 : vector<1x96xf32> to vector<6x96xf32>
    %42 = arith.addf %39, %41 : vector<6x96xf32>
    %43 = vector.extract_strided_slice %42 {offsets = [0, 0], sizes = [6, 32], strides = [1, 1]} : vector<6x96xf32> to vector<6x32xf32>
    %cst_20 = arith.constant 0.353553385 : f32
    %44 = vector.broadcast %cst_20 : f32 to vector<6x32xf32>
    %45 = arith.mulf %43, %44 : vector<6x32xf32>
    %46 = vector.shape_cast %45 : vector<6x32xf32> to vector<1x6x32xf32>
    %47 = vector.extract_strided_slice %42 {offsets = [0, 32], sizes = [6, 32], strides = [1, 1]} : vector<6x96xf32> to vector<6x32xf32>
    %48 = vector.shape_cast %47 : vector<6x32xf32> to vector<1x6x32xf32>
    %49 = vector.extract_strided_slice %42 {offsets = [0, 64], sizes = [6, 32], strides = [1, 1]} : vector<6x96xf32> to vector<6x32xf32>
    %50 = vector.shape_cast %49 : vector<6x32xf32> to vector<1x6x32xf32>
    %51 = vector.extract_strided_slice %46 {offsets = [0, 0, 0], sizes = [1, 6, 8], strides = [1, 1, 1]} : vector<1x6x32xf32> to vector<1x6x8xf32>
    %52 = vector.extract_strided_slice %48 {offsets = [0, 0, 0], sizes = [1, 6, 8], strides = [1, 1, 1]} : vector<1x6x32xf32> to vector<1x6x8xf32>
    "tpu.trace_start"() <{level = 10 : i32, message = "bqd,bkd->bqk"}> : () -> ()
    %cst_21 = arith.constant dense<0.000000e+00> : vector<1x6x6xf32>
    %53 = tpu.matmul %51, %52, %cst_21 {dimension_numbers = #tpu.dot_dimension_numbers<[2], [2], [1], [1], [0, 0, 0, 1, 1, 1], [0], [0]>} : vector<1x6x8xf32>, vector<1x6x8xf32>, vector<1x6x6xf32> -> vector<1x6x6xf32>
    "tpu.trace_stop"() : () -> ()
    %cst_22 = arith.constant dense<0xFF800000> : vector<1x6xf32>
    %54 = vector.multi_reduction <maximumf>, %53, %cst_22 [2] : vector<1x6x6xf32> to vector<1x6xf32>
    %55 = vector.shape_cast %54 : vector<1x6xf32> to vector<1x6x1xf32>
    %56 = vector.broadcast %55 : vector<1x6x1xf32> to vector<1x6x6xf32>
    %57 = arith.subf %53, %56 : vector<1x6x6xf32>
    %58 = math.exp %57 : vector<1x6x6xf32>
    %cst_23 = arith.constant dense<0.000000e+00> : vector<1x6xf32>
    %59 = vector.multi_reduction <add>, %58, %cst_23 [2] : vector<1x6x6xf32> to vector<1x6xf32>
    %60 = vector.shape_cast %59 : vector<1x6xf32> to vector<1x6x1xf32>
    %61 = tpu.reciprocal %60 {approx = true} : vector<1x6x1xf32> -> vector<1x6x1xf32>
    %62 = vector.broadcast %61 : vector<1x6x1xf32> to vector<1x6x6xf32>
    %63 = arith.mulf %58, %62 : vector<1x6x6xf32>
    %64 = vector.extract_strided_slice %50 {offsets = [0, 0, 0], sizes = [1, 6, 8], strides = [1, 1, 1]} : vector<1x6x32xf32> to vector<1x6x8xf32>
    "tpu.trace_start"() <{level = 10 : i32, message = "bqk,bkd->bqd"}> : () -> ()
    %cst_24 = arith.constant dense<0.000000e+00> : vector<1x6x8xf32>
    %65 = tpu.matmul %63, %64, %cst_24 {dimension_numbers = #tpu.dot_dimension_numbers<[2], [1], [1], [2], [0, 0, 0, 1, 1, 2], [0], [0]>} : vector<1x6x6xf32>, vector<1x6x8xf32>, vector<1x6x8xf32> -> vector<1x6x8xf32>
    "tpu.trace_stop"() : () -> ()
    %66 = vector.extract_strided_slice %46 {offsets = [0, 0, 8], sizes = [1, 6, 8], strides = [1, 1, 1]} : vector<1x6x32xf32> to vector<1x6x8xf32>
    %67 = vector.extract_strided_slice %48 {offsets = [0, 0, 8], sizes = [1, 6, 8], strides = [1, 1, 1]} : vector<1x6x32xf32> to vector<1x6x8xf32>
    "tpu.trace_start"() <{level = 10 : i32, message = "bqd,bkd->bqk"}> : () -> ()
    %cst_25 = arith.constant dense<0.000000e+00> : vector<1x6x6xf32>
    %68 = tpu.matmul %66, %67, %cst_25 {dimension_numbers = #tpu.dot_dimension_numbers<[2], [2], [1], [1], [0, 0, 0, 1, 1, 1], [0], [0]>} : vector<1x6x8xf32>, vector<1x6x8xf32>, vector<1x6x6xf32> -> vector<1x6x6xf32>
    "tpu.trace_stop"() : () -> ()
    %cst_26 = arith.constant dense<0xFF800000> : vector<1x6xf32>
    %69 = vector.multi_reduction <maximumf>, %68, %cst_26 [2] : vector<1x6x6xf32> to vector<1x6xf32>
    %70 = vector.shape_cast %69 : vector<1x6xf32> to vector<1x6x1xf32>
    %71 = vector.broadcast %70 : vector<1x6x1xf32> to vector<1x6x6xf32>
    %72 = arith.subf %68, %71 : vector<1x6x6xf32>
    %73 = math.exp %72 : vector<1x6x6xf32>
    %cst_27 = arith.constant dense<0.000000e+00> : vector<1x6xf32>
    %74 = vector.multi_reduction <add>, %73, %cst_27 [2] : vector<1x6x6xf32> to vector<1x6xf32>
    %75 = vector.shape_cast %74 : vector<1x6xf32> to vector<1x6x1xf32>
    %76 = tpu.reciprocal %75 {approx = true} : vector<1x6x1xf32> -> vector<1x6x1xf32>
    %77 = vector.broadcast %76 : vector<1x6x1xf32> to vector<1x6x6xf32>
    %78 = arith.mulf %73, %77 : vector<1x6x6xf32>
    %79 = vector.extract_strided_slice %50 {offsets = [0, 0, 8], sizes = [1, 6, 8], strides = [1, 1, 1]} : vector<1x6x32xf32> to vector<1x6x8xf32>
    "tpu.trace_start"() <{level = 10 : i32, message = "bqk,bkd->bqd"}> : () -> ()
    %cst_28 = arith.constant dense<0.000000e+00> : vector<1x6x8xf32>
    %80 = tpu.matmul %78, %79, %cst_28 {dimension_numbers = #tpu.dot_dimension_numbers<[2], [1], [1], [2], [0, 0, 0, 1, 1, 2], [0], [0]>} : vector<1x6x6xf32>, vector<1x6x8xf32>, vector<1x6x8xf32> -> vector<1x6x8xf32>
    "tpu.trace_stop"() : () -> ()
    %81 = vector.extract_strided_slice %46 {offsets = [0, 0, 16], sizes = [1, 6, 8], strides = [1, 1, 1]} : vector<1x6x32xf32> to vector<1x6x8xf32>
    %82 = vector.extract_strided_slice %48 {offsets = [0, 0, 16], sizes = [1, 6, 8], strides = [1, 1, 1]} : vector<1x6x32xf32> to vector<1x6x8xf32>
    "tpu.trace_start"() <{level = 10 : i32, message = "bqd,bkd->bqk"}> : () -> ()
    %cst_29 = arith.constant dense<0.000000e+00> : vector<1x6x6xf32>
    %83 = tpu.matmul %81, %82, %cst_29 {dimension_numbers = #tpu.dot_dimension_numbers<[2], [2], [1], [1], [0, 0, 0, 1, 1, 1], [0], [0]>} : vector<1x6x8xf32>, vector<1x6x8xf32>, vector<1x6x6xf32> -> vector<1x6x6xf32>
    "tpu.trace_stop"() : () -> ()
    %cst_30 = arith.constant dense<0xFF800000> : vector<1x6xf32>
    %84 = vector.multi_reduction <maximumf>, %83, %cst_30 [2] : vector<1x6x6xf32> to vector<1x6xf32>
    %85 = vector.shape_cast %84 : vector<1x6xf32> to vector<1x6x1xf32>
    %86 = vector.broadcast %85 : vector<1x6x1xf32> to vector<1x6x6xf32>
    %87 = arith.subf %83, %86 : vector<1x6x6xf32>
    %88 = math.exp %87 : vector<1x6x6xf32>
    %cst_31 = arith.constant dense<0.000000e+00> : vector<1x6xf32>
    %89 = vector.multi_reduction <add>, %88, %cst_31 [2] : vector<1x6x6xf32> to vector<1x6xf32>
    %90 = vector.shape_cast %89 : vector<1x6xf32> to vector<1x6x1xf32>
    %91 = tpu.reciprocal %90 {approx = true} : vector<1x6x1xf32> -> vector<1x6x1xf32>
    %92 = vector.broadcast %91 : vector<1x6x1xf32> to vector<1x6x6xf32>
    %93 = arith.mulf %88, %92 : vector<1x6x6xf32>
    %94 = vector.extract_strided_slice %50 {offsets = [0, 0, 16], sizes = [1, 6, 8], strides = [1, 1, 1]} : vector<1x6x32xf32> to vector<1x6x8xf32>
    "tpu.trace_start"() <{level = 10 : i32, message = "bqk,bkd->bqd"}> : () -> ()
    %cst_32 = arith.constant dense<0.000000e+00> : vector<1x6x8xf32>
    %95 = tpu.matmul %93, %94, %cst_32 {dimension_numbers = #tpu.dot_dimension_numbers<[2], [1], [1], [2], [0, 0, 0, 1, 1, 2], [0], [0]>} : vector<1x6x6xf32>, vector<1x6x8xf32>, vector<1x6x8xf32> -> vector<1x6x8xf32>
    "tpu.trace_stop"() : () -> ()
    %96 = vector.extract_strided_slice %46 {offsets = [0, 0, 24], sizes = [1, 6, 8], strides = [1, 1, 1]} : vector<1x6x32xf32> to vector<1x6x8xf32>
    %97 = vector.extract_strided_slice %48 {offsets = [0, 0, 24], sizes = [1, 6, 8], strides = [1, 1, 1]} : vector<1x6x32xf32> to vector<1x6x8xf32>
    "tpu.trace_start"() <{level = 10 : i32, message = "bqd,bkd->bqk"}> : () -> ()
    %cst_33 = arith.constant dense<0.000000e+00> : vector<1x6x6xf32>
    %98 = tpu.matmul %96, %97, %cst_33 {dimension_numbers = #tpu.dot_dimension_numbers<[2], [2], [1], [1], [0, 0, 0, 1, 1, 1], [0], [0]>} : vector<1x6x8xf32>, vector<1x6x8xf32>, vector<1x6x6xf32> -> vector<1x6x6xf32>
    "tpu.trace_stop"() : () -> ()
    %cst_34 = arith.constant dense<0xFF800000> : vector<1x6xf32>
    %99 = vector.multi_reduction <maximumf>, %98, %cst_34 [2] : vector<1x6x6xf32> to vector<1x6xf32>
    %100 = vector.shape_cast %99 : vector<1x6xf32> to vector<1x6x1xf32>
    %101 = vector.broadcast %100 : vector<1x6x1xf32> to vector<1x6x6xf32>
    %102 = arith.subf %98, %101 : vector<1x6x6xf32>
    %103 = math.exp %102 : vector<1x6x6xf32>
    %cst_35 = arith.constant dense<0.000000e+00> : vector<1x6xf32>
    %104 = vector.multi_reduction <add>, %103, %cst_35 [2] : vector<1x6x6xf32> to vector<1x6xf32>
    %105 = vector.shape_cast %104 : vector<1x6xf32> to vector<1x6x1xf32>
    %106 = tpu.reciprocal %105 {approx = true} : vector<1x6x1xf32> -> vector<1x6x1xf32>
    %107 = vector.broadcast %106 : vector<1x6x1xf32> to vector<1x6x6xf32>
    %108 = arith.mulf %103, %107 : vector<1x6x6xf32>
    %109 = vector.extract_strided_slice %50 {offsets = [0, 0, 24], sizes = [1, 6, 8], strides = [1, 1, 1]} : vector<1x6x32xf32> to vector<1x6x8xf32>
    "tpu.trace_start"() <{level = 10 : i32, message = "bqk,bkd->bqd"}> : () -> ()
    %cst_36 = arith.constant dense<0.000000e+00> : vector<1x6x8xf32>
    %110 = tpu.matmul %108, %109, %cst_36 {dimension_numbers = #tpu.dot_dimension_numbers<[2], [1], [1], [2], [0, 0, 0, 1, 1, 2], [0], [0]>} : vector<1x6x6xf32>, vector<1x6x8xf32>, vector<1x6x8xf32> -> vector<1x6x8xf32>
    "tpu.trace_stop"() : () -> ()
    %111 = tpu.concatenate %65, %80, %95, %110 in 2 : vector<1x6x8xf32>, vector<1x6x8xf32>, vector<1x6x8xf32>, vector<1x6x8xf32> -> vector<1x6x32xf32>
    %112 = vector.shape_cast %111 : vector<1x6x32xf32> to vector<6x32xf32>
    %c0_37 = arith.constant 0 : index
    %c0_38 = arith.constant 0 : index
    %113 = vector.load %arg8[%c0_37, %c0_38] : memref<32x32xf32, #tpu.memory_space<vmem>>, vector<32x32xf32>
    %cst_39 = arith.constant dense<0.000000e+00> : vector<6x32xf32>
    %114 = tpu.matmul %112, %113, %cst_39 {dimension_numbers = #tpu.dot_dimension_numbers<[1], [0], [0], [1], [0, 0, 1, 1], [], []>} : vector<6x32xf32>, vector<32x32xf32>, vector<6x32xf32> -> vector<6x32xf32>
    %c0_40 = arith.constant 0 : index
    %c0_41 = arith.constant 0 : index
    %115 = vector.load %arg9[%c0_40, %c0_41] : memref<1x32xf32, #tpu.memory_space<vmem>>, vector<1x32xf32>
    %116 = vector.broadcast %115 : vector<1x32xf32> to vector<6x32xf32>
    %117 = arith.addf %114, %116 : vector<6x32xf32>
    %118 = arith.addf %37, %117 : vector<6x32xf32>
    %c0_42 = arith.constant 0 : index
    %c0_43 = arith.constant 0 : index
    %119 = vector.load %arg10[%c0_42, %c0_43] : memref<1x32xf32, #tpu.memory_space<vmem>>, vector<1x32xf32>
    %c0_44 = arith.constant 0 : index
    %c0_45 = arith.constant 0 : index
    %120 = vector.load %arg11[%c0_44, %c0_45] : memref<1x32xf32, #tpu.memory_space<vmem>>, vector<1x32xf32>
    %cst_46 = arith.constant dense<0.000000e+00> : vector<6xf32>
    %121 = vector.multi_reduction <add>, %118, %cst_46 [1] : vector<6x32xf32> to vector<6xf32>
    %122 = vector.shape_cast %121 : vector<6xf32> to vector<6x1xf32>
    %cst_47 = arith.constant 3.200000e+01 : f32
    %123 = vector.broadcast %cst_47 : f32 to vector<6x1xf32>
    %124 = arith.divf %122, %123 : vector<6x1xf32>
    %125 = vector.broadcast %124 : vector<6x1xf32> to vector<6x32xf32>
    %126 = arith.subf %118, %125 : vector<6x32xf32>
    %127 = arith.mulf %126, %126 : vector<6x32xf32>
    %cst_48 = arith.constant dense<0.000000e+00> : vector<6xf32>
    %128 = vector.multi_reduction <add>, %127, %cst_48 [1] : vector<6x32xf32> to vector<6xf32>
    %129 = vector.shape_cast %128 : vector<6xf32> to vector<6x1xf32>
    %cst_49 = arith.constant 3.200000e+01 : f32
    %130 = vector.broadcast %cst_49 : f32 to vector<6x1xf32>
    %131 = arith.divf %129, %130 : vector<6x1xf32>
    %132 = vector.broadcast %124 : vector<6x1xf32> to vector<6x32xf32>
    %133 = arith.subf %118, %132 : vector<6x32xf32>
    %cst_50 = arith.constant 9.99999974E-6 : f32
    %134 = vector.broadcast %cst_50 : f32 to vector<6x1xf32>
    %135 = arith.addf %131, %134 : vector<6x1xf32>
    %136 = math.rsqrt %135 : vector<6x1xf32>
    %137 = vector.broadcast %136 : vector<6x1xf32> to vector<6x32xf32>
    %138 = arith.mulf %133, %137 : vector<6x32xf32>
    %139 = vector.broadcast %119 : vector<1x32xf32> to vector<6x32xf32>
    %140 = arith.mulf %138, %139 : vector<6x32xf32>
    %141 = vector.broadcast %120 : vector<1x32xf32> to vector<6x32xf32>
    %142 = arith.addf %140, %141 : vector<6x32xf32>
    %c0_51 = arith.constant 0 : index
    %c0_52 = arith.constant 0 : index
    %143 = vector.load %arg12[%c0_51, %c0_52] : memref<32x64xf32, #tpu.memory_space<vmem>>, vector<32x64xf32>
    %cst_53 = arith.constant dense<0.000000e+00> : vector<6x64xf32>
    %144 = tpu.matmul %142, %143, %cst_53 {dimension_numbers = #tpu.dot_dimension_numbers<[1], [0], [0], [1], [0, 0, 1, 1], [], []>} : vector<6x32xf32>, vector<32x64xf32>, vector<6x64xf32> -> vector<6x64xf32>
    %c0_54 = arith.constant 0 : index
    %c0_55 = arith.constant 0 : index
    %145 = vector.load %arg13[%c0_54, %c0_55] : memref<1x64xf32, #tpu.memory_space<vmem>>, vector<1x64xf32>
    %146 = vector.broadcast %145 : vector<1x64xf32> to vector<6x64xf32>
    %147 = arith.addf %144, %146 : vector<6x64xf32>
    %cst_56 = arith.constant 0.000000e+00 : f32
    %148 = vector.broadcast %cst_56 : f32 to vector<6x64xf32>
    %149 = arith.maximumf %147, %148 : vector<6x64xf32>
    %c0_57 = arith.constant 0 : index
    %c0_58 = arith.constant 0 : index
    %150 = vector.load %arg14[%c0_57, %c0_58] : memref<64x32xf32, #tpu.memory_space<vmem>>, vector<64x32xf32>
    %cst_59 = arith.constant dense<0.000000e+00> : vector<6x32xf32>
    %151 = tpu.matmul %149, %150, %cst_59 {dimension_numbers = #tpu.dot_dimension_numbers<[1], [0], [0], [1], [0, 0, 1, 1], [], []>} : vector<6x64xf32>, vector<64x32xf32>, vector<6x32xf32> -> vector<6x32xf32>
    %c0_60 = arith.constant 0 : index
    %c0_61 = arith.constant 0 : index
    %152 = vector.load %arg15[%c0_60, %c0_61] : memref<1x32xf32, #tpu.memory_space<vmem>>, vector<1x32xf32>
    %153 = vector.broadcast %152 : vector<1x32xf32> to vector<6x32xf32>
    %154 = arith.addf %151, %153 : vector<6x32xf32>
    %155 = arith.addf %142, %154 : vector<6x32xf32>
    %c0_62 = arith.constant 0 : index
    %c0_63 = arith.constant 0 : index
    %156 = vector.load %arg16[%c0_62, %c0_63] : memref<1x32xf32, #tpu.memory_space<vmem>>, vector<1x32xf32>
    %c0_64 = arith.constant 0 : index
    %c0_65 = arith.constant 0 : index
    %157 = vector.load %arg17[%c0_64, %c0_65] : memref<1x32xf32, #tpu.memory_space<vmem>>, vector<1x32xf32>
    %cst_66 = arith.constant dense<0.000000e+00> : vector<6xf32>
    %158 = vector.multi_reduction <add>, %155, %cst_66 [1] : vector<6x32xf32> to vector<6xf32>
    %159 = vector.shape_cast %158 : vector<6xf32> to vector<6x1xf32>
    %cst_67 = arith.constant 3.200000e+01 : f32
    %160 = vector.broadcast %cst_67 : f32 to vector<6x1xf32>
    %161 = arith.divf %159, %160 : vector<6x1xf32>
    %162 = vector.broadcast %161 : vector<6x1xf32> to vector<6x32xf32>
    %163 = arith.subf %155, %162 : vector<6x32xf32>
    %164 = arith.mulf %163, %163 : vector<6x32xf32>
    %cst_68 = arith.constant dense<0.000000e+00> : vector<6xf32>
    %165 = vector.multi_reduction <add>, %164, %cst_68 [1] : vector<6x32xf32> to vector<6xf32>
    %166 = vector.shape_cast %165 : vector<6xf32> to vector<6x1xf32>
    %cst_69 = arith.constant 3.200000e+01 : f32
    %167 = vector.broadcast %cst_69 : f32 to vector<6x1xf32>
    %168 = arith.divf %166, %167 : vector<6x1xf32>
    %169 = vector.broadcast %161 : vector<6x1xf32> to vector<6x32xf32>
    %170 = arith.subf %155, %169 : vector<6x32xf32>
    %cst_70 = arith.constant 9.99999974E-6 : f32
    %171 = vector.broadcast %cst_70 : f32 to vector<6x1xf32>
    %172 = arith.addf %168, %171 : vector<6x1xf32>
    %173 = math.rsqrt %172 : vector<6x1xf32>
    %174 = vector.broadcast %173 : vector<6x1xf32> to vector<6x32xf32>
    %175 = arith.mulf %170, %174 : vector<6x32xf32>
    %176 = vector.broadcast %156 : vector<1x32xf32> to vector<6x32xf32>
    %177 = arith.mulf %175, %176 : vector<6x32xf32>
    %178 = vector.broadcast %157 : vector<1x32xf32> to vector<6x32xf32>
    %179 = arith.addf %177, %178 : vector<6x32xf32>
    %c0_71 = arith.constant 0 : index
    %c0_72 = arith.constant 0 : index
    %180 = vector.load %arg18[%c0_71, %c0_72] : memref<96x32xf32, #tpu.memory_space<vmem>>, vector<96x32xf32>
    %cst_73 = arith.constant 0.000000e+00 : f32
    %181 = vector.broadcast %cst_73 : f32 to vector<8x32xf32>
    %c0_74 = arith.constant 0 : index
    %c0_75 = arith.constant 0 : index
    %182 = vector.load %arg19[%c0_74, %c0_75] : memref<1x32xf32, #tpu.memory_space<vmem>>, vector<1x32xf32>
    %183 = vector.broadcast %182 : vector<1x32xf32> to vector<8x32xf32>
    %184 = arith.addf %181, %183 : vector<8x32xf32>
    %185 = vector.shape_cast %179 : vector<6x32xf32> to vector<1x6x32xf32>
    %cst_76 = arith.constant 0.000000e+00 : f32
    %186 = vector.broadcast %cst_76 : f32 to vector<1x2x32xf32>
    %187 = tpu.concatenate %186, %185, %186 in 1 : vector<1x2x32xf32>, vector<1x6x32xf32>, vector<1x2x32xf32> -> vector<1x10x32xf32>
    %188 = vector.extract_strided_slice %187 {offsets = [0, 0, 0], sizes = [1, 8, 32], strides = [1, 1, 1]} : vector<1x10x32xf32> to vector<1x8x32xf32>
    %189 = vector.shape_cast %188 : vector<1x8x32xf32> to vector<8x32xf32>
    %190 = vector.extract_strided_slice %180 {offsets = [0, 0], sizes = [32, 32], strides = [1, 1]} : vector<96x32xf32> to vector<32x32xf32>
    %cst_77 = arith.constant dense<0.000000e+00> : vector<8x32xf32>
    %191 = tpu.matmul %189, %190, %cst_77 {dimension_numbers = #tpu.dot_dimension_numbers<[1], [0], [0], [1], [0, 0, 1, 1], [], []>} : vector<8x32xf32>, vector<32x32xf32>, vector<8x32xf32> -> vector<8x32xf32>
    %192 = arith.addf %184, %191 : vector<8x32xf32>
    %193 = vector.extract_strided_slice %187 {offsets = [0, 1, 0], sizes = [1, 8, 32], strides = [1, 1, 1]} : vector<1x10x32xf32> to vector<1x8x32xf32>
    %194 = vector.shape_cast %193 : vector<1x8x32xf32> to vector<8x32xf32>
    %195 = vector.extract_strided_slice %180 {offsets = [32, 0], sizes = [32, 32], strides = [1, 1]} : vector<96x32xf32> to vector<32x32xf32>
    %cst_78 = arith.constant dense<0.000000e+00> : vector<8x32xf32>
    %196 = tpu.matmul %194, %195, %cst_78 {dimension_numbers = #tpu.dot_dimension_numbers<[1], [0], [0], [1], [0, 0, 1, 1], [], []>} : vector<8x32xf32>, vector<32x32xf32>, vector<8x32xf32> -> vector<8x32xf32>
    %197 = arith.addf %192, %196 : vector<8x32xf32>
    %198 = vector.extract_strided_slice %187 {offsets = [0, 2, 0], sizes = [1, 8, 32], strides = [1, 1, 1]} : vector<1x10x32xf32> to vector<1x8x32xf32>
    %199 = vector.shape_cast %198 : vector<1x8x32xf32> to vector<8x32xf32>
    %200 = vector.extract_strided_slice %180 {offsets = [64, 0], sizes = [32, 32], strides = [1, 1]} : vector<96x32xf32> to vector<32x32xf32>
    %cst_79 = arith.constant dense<0.000000e+00> : vector<8x32xf32>
    %201 = tpu.matmul %199, %200, %cst_79 {dimension_numbers = #tpu.dot_dimension_numbers<[1], [0], [0], [1], [0, 0, 1, 1], [], []>} : vector<8x32xf32>, vector<32x32xf32>, vector<8x32xf32> -> vector<8x32xf32>
    %202 = arith.addf %197, %201 : vector<8x32xf32>
    %cst_80 = arith.constant 0.000000e+00 : f32
    %203 = vector.broadcast %cst_80 : f32 to vector<8x32xf32>
    %204 = arith.maximumf %202, %203 : vector<8x32xf32>
    %c0_81 = arith.constant 0 : index
    %c0_82 = arith.constant 0 : index
    %205 = vector.load %arg20[%c0_81, %c0_82] : memref<1x32xf32, #tpu.memory_space<vmem>>, vector<1x32xf32>
    %c0_83 = arith.constant 0 : index
    %c0_84 = arith.constant 0 : index
    %206 = vector.load %arg21[%c0_83, %c0_84] : memref<1x32xf32, #tpu.memory_space<vmem>>, vector<1x32xf32>
    %cst_85 = arith.constant dense<0.000000e+00> : vector<8xf32>
    %207 = vector.multi_reduction <add>, %204, %cst_85 [1] : vector<8x32xf32> to vector<8xf32>
    %208 = vector.shape_cast %207 : vector<8xf32> to vector<8x1xf32>
    %cst_86 = arith.constant 3.200000e+01 : f32
    %209 = vector.broadcast %cst_86 : f32 to vector<8x1xf32>
    %210 = arith.divf %208, %209 : vector<8x1xf32>
    %211 = vector.broadcast %210 : vector<8x1xf32> to vector<8x32xf32>
    %212 = arith.subf %204, %211 : vector<8x32xf32>
    %213 = arith.mulf %212, %212 : vector<8x32xf32>
    %cst_87 = arith.constant dense<0.000000e+00> : vector<8xf32>
    %214 = vector.multi_reduction <add>, %213, %cst_87 [1] : vector<8x32xf32> to vector<8xf32>
    %215 = vector.shape_cast %214 : vector<8xf32> to vector<8x1xf32>
    %cst_88 = arith.constant 3.200000e+01 : f32
    %216 = vector.broadcast %cst_88 : f32 to vector<8x1xf32>
    %217 = arith.divf %215, %216 : vector<8x1xf32>
    %218 = vector.broadcast %210 : vector<8x1xf32> to vector<8x32xf32>
    %219 = arith.subf %204, %218 : vector<8x32xf32>
    %cst_89 = arith.constant 9.99999974E-6 : f32
    %220 = vector.broadcast %cst_89 : f32 to vector<8x1xf32>
    %221 = arith.addf %217, %220 : vector<8x1xf32>
    %222 = math.rsqrt %221 : vector<8x1xf32>
    %223 = vector.broadcast %222 : vector<8x1xf32> to vector<8x32xf32>
    %224 = arith.mulf %219, %223 : vector<8x32xf32>
    %225 = vector.broadcast %205 : vector<1x32xf32> to vector<8x32xf32>
    %226 = arith.mulf %224, %225 : vector<8x32xf32>
    %227 = vector.broadcast %206 : vector<1x32xf32> to vector<8x32xf32>
    %228 = arith.addf %226, %227 : vector<8x32xf32>
    %229 = arith.addf %0, %228 : vector<8x32xf32>
    %c0_90 = arith.constant 0 : index
    %c0_91 = arith.constant 0 : index
    %230 = vector.load %arg22[%c0_90, %c0_91] : memref<8x32xf32, #tpu.memory_space<vmem>>, vector<8x32xf32>
    tpu.vector_store %arg22[%c0_90, %c0_91], %229 {strides = array<i32>} : memref<8x32xf32, #tpu.memory_space<vmem>>, vector<8x32xf32>,
    return
  }
  func.func @transform_0(%arg0: i32) -> (i32, i32) {
    %c0_i32 = arith.constant 0 : i32
    %c0_i32_0 = arith.constant 0 : i32
    return %arg0, %c0_i32 : i32, i32
  }
  func.func @transform_1(%arg0: i32) -> (i32, i32) {
    %c0_i32 = arith.constant 0 : i32
    %c0_i32_0 = arith.constant 0 : i32
    %c0_i32_1 = arith.constant 0 : i32
    return %c0_i32, %c0_i32_0 : i32, i32
  }
  func.func @transform_2(%arg0: i32) -> (i32, i32) {
    %c0_i32 = arith.constant 0 : i32
    %c0_i32_0 = arith.constant 0 : i32
    %c0_i32_1 = arith.constant 0 : i32
    return %c0_i32, %c0_i32_0 : i32, i32
  }
  func.func @transform_3(%arg0: i32) -> (i32, i32) {
    %c0_i32 = arith.constant 0 : i32
    %c0_i32_0 = arith.constant 0 : i32
    %c0_i32_1 = arith.constant 0 : i32
    return %c0_i32, %c0_i32_0 : i32, i32
  }
  func.func @transform_4(%arg0: i32) -> (i32, i32) {
    %c0_i32 = arith.constant 0 : i32
    %c0_i32_0 = arith.constant 0 : i32
    %c0_i32_1 = arith.constant 0 : i32
    return %c0_i32, %c0_i32_0 : i32, i32
  }
  func.func @transform_5(%arg0: i32) -> (i32, i32) {
    %c0_i32 = arith.constant 0 : i32
    %c0_i32_0 = arith.constant 0 : i32
    %c0_i32_1 = arith.constant 0 : i32
    return %c0_i32, %c0_i32_0 : i32, i32
  }
  func.func @transform_6(%arg0: i32) -> (i32, i32) {
    %c0_i32 = arith.constant 0 : i32
    %c0_i32_0 = arith.constant 0 : i32
    %c0_i32_1 = arith.constant 0 : i32
    return %c0_i32, %c0_i32_0 : i32, i32
  }
  func.func @transform_7(%arg0: i32) -> (i32, i32) {
    %c0_i32 = arith.constant 0 : i32
    %c0_i32_0 = arith.constant 0 : i32
    %c0_i32_1 = arith.constant 0 : i32
    return %c0_i32, %c0_i32_0 : i32, i32
  }
  func.func @transform_8(%arg0: i32) -> (i32, i32) {
    %c0_i32 = arith.constant 0 : i32
    %c0_i32_0 = arith.constant 0 : i32
    %c0_i32_1 = arith.constant 0 : i32
    return %c0_i32, %c0_i32_0 : i32, i32
  }
  func.func @transform_9(%arg0: i32) -> (i32, i32) {
    %c0_i32 = arith.constant 0 : i32
    %c0_i32_0 = arith.constant 0 : i32
    %c0_i32_1 = arith.constant 0 : i32
    return %c0_i32, %c0_i32_0 : i32, i32
  }
  func.func @transform_10(%arg0: i32) -> (i32, i32) {
    %c0_i32 = arith.constant 0 : i32
    %c0_i32_0 = arith.constant 0 : i32
    %c0_i32_1 = arith.constant 0 : i32
    return %c0_i32, %c0_i32_0 : i32, i32
  }
  func.func @transform_11(%arg0: i32) -> (i32, i32) {
    %c0_i32 = arith.constant 0 : i32
    %c0_i32_0 = arith.constant 0 : i32
    %c0_i32_1 = arith.constant 0 : i32
    return %c0_i32, %c0_i32_0 : i32, i32
  }
  func.func @transform_12(%arg0: i32) -> (i32, i32) {
    %c0_i32 = arith.constant 0 : i32
    %c0_i32_0 = arith.constant 0 : i32
    %c0_i32_1 = arith.constant 0 : i32
    return %c0_i32, %c0_i32_0 : i32, i32
  }
  func.func @transform_13(%arg0: i32) -> (i32, i32) {
    %c0_i32 = arith.constant 0 : i32
    %c0_i32_0 = arith.constant 0 : i32
    %c0_i32_1 = arith.constant 0 : i32
    return %c0_i32, %c0_i32_0 : i32, i32
  }
  func.func @transform_14(%arg0: i32) -> (i32, i32) {
    %c0_i32 = arith.constant 0 : i32
    %c0_i32_0 = arith.constant 0 : i32
    %c0_i32_1 = arith.constant 0 : i32
    return %c0_i32, %c0_i32_0 : i32, i32
  }
  func.func @transform_15(%arg0: i32) -> (i32, i32) {
    %c0_i32 = arith.constant 0 : i32
    %c0_i32_0 = arith.constant 0 : i32
    %c0_i32_1 = arith.constant 0 : i32
    return %c0_i32, %c0_i32_0 : i32, i32
  }
  func.func @transform_16(%arg0: i32) -> (i32, i32) {
    %c0_i32 = arith.constant 0 : i32
    %c0_i32_0 = arith.constant 0 : i32
    %c0_i32_1 = arith.constant 0 : i32
    return %c0_i32, %c0_i32_0 : i32, i32
  }
  func.func @transform_17(%arg0: i32) -> (i32, i32) {
    %c0_i32 = arith.constant 0 : i32
    %c0_i32_0 = arith.constant 0 : i32
    %c0_i32_1 = arith.constant 0 : i32
    return %c0_i32, %c0_i32_0 : i32, i32
  }
  func.func @transform_18(%arg0: i32) -> (i32, i32) {
    %c0_i32 = arith.constant 0 : i32
    %c0_i32_0 = arith.constant 0 : i32
    %c0_i32_1 = arith.constant 0 : i32
    return %c0_i32, %c0_i32_0 : i32, i32
  }
  func.func @transform_19(%arg0: i32) -> (i32, i32) {
    %c0_i32 = arith.constant 0 : i32
    %c0_i32_0 = arith.constant 0 : i32
    %c0_i32_1 = arith.constant 0 : i32
    return %c0_i32, %c0_i32_0 : i32, i32
  }
  func.func @transform_20(%arg0: i32) -> (i32, i32) {
    %c0_i32 = arith.constant 0 : i32
    %c0_i32_0 = arith.constant 0 : i32
    %c0_i32_1 = arith.constant 0 : i32
    return %c0_i32, %c0_i32_0 : i32, i32
  }
  func.func @transform_21(%arg0: i32) -> (i32, i32) {
    %c0_i32 = arith.constant 0 : i32
    %c0_i32_0 = arith.constant 0 : i32
    return %arg0, %c0_i32 : i32, i32
  }
}

</mosaic_0001>

<llo_original>
// kernel: tpu_custom_call.1
$region0: #{tpu_custom_call.1}
  #allocation0 [shape = 'u32[]', space=smem, size = 0x4, offset = 0x4, fixed_abs, tag = 'smem constant byte address 0x4 - core index']
  #allocation1 [shape = 'u32[72,128]{1,0:T(1,128)}', space=vmem, size = 0x9000, scoped, tag = 'internal scratch']
  %s0 = inlined_call_operand.vmem [shape: f32[16,32], index: 0, kind: input, shape index: {}]
  %s1 = inlined_call_operand.vmem [shape: f32[96,32], index: 1, kind: input, shape index: {}]
  %s2 = inlined_call_operand.vmem [shape: f32[1,32], index: 2, kind: input, shape index: {}]
  %s3 = inlined_call_operand.vmem [shape: f32[1,32], index: 3, kind: input, shape index: {}]
  %s4 = inlined_call_operand.vmem [shape: f32[1,32], index: 4, kind: input, shape index: {}]
  %s5 = inlined_call_operand.vmem [shape: f32[32,96], index: 5, kind: input, shape index: {}]
  %s6 = inlined_call_operand.vmem [shape: f32[1,96], index: 6, kind: input, shape index: {}]
  %s7 = inlined_call_operand.vmem [shape: f32[32,32], index: 7, kind: input, shape index: {}]
  %s8 = inlined_call_operand.vmem [shape: f32[1,32], index: 8, kind: input, shape index: {}]
  %s9 = inlined_call_operand.vmem [shape: f32[1,32], index: 9, kind: input, shape index: {}]
  %s10 = inlined_call_operand.vmem [shape: f32[1,32], index: 10, kind: input, shape index: {}]
  %s11 = inlined_call_operand.vmem [shape: f32[32,64], index: 11, kind: input, shape index: {}]
  %s12 = inlined_call_operand.vmem [shape: f32[1,64], index: 12, kind: input, shape index: {}]
  %s13 = inlined_call_operand.vmem [shape: f32[64,32], index: 13, kind: input, shape index: {}]
  %s14 = inlined_call_operand.vmem [shape: f32[1,32], index: 14, kind: input, shape index: {}]
  %s15 = inlined_call_operand.vmem [shape: f32[1,32], index: 15, kind: input, shape index: {}]
  %s16 = inlined_call_operand.vmem [shape: f32[1,32], index: 16, kind: input, shape index: {}]
  %s17 = inlined_call_operand.vmem [shape: f32[96,32], index: 17, kind: input, shape index: {}]
  %s18 = inlined_call_operand.vmem [shape: f32[1,32], index: 18, kind: input, shape index: {}]
  %s19 = inlined_call_operand.vmem [shape: f32[1,32], index: 19, kind: input, shape index: {}]
  %s20 = inlined_call_operand.vmem [shape: f32[1,32], index: 20, kind: input, shape index: {}]
  %s21 = inlined_call_operand.hbm [shape: f32[16,32], index: 21, kind: output, shape index: {}]
  %s22 = sld [smem:[#allocation0]]
  $region117: #{tpu_custom_call.1} parent=0
    _
  %s24 = ssub.s32 1, %s22
  %s25 = scalar_select 0, %s24, %s22
  $region1: #{tpu_custom_call.1} parent=0
    #allocation2 [shape = 'u8[8192]{0}', space=vmem, size = 0x2000, scoped, tag = 'output window, operand 0']
    #allocation3 [shape = 's32[2]{0}', space=sflag, size = 0x8, scoped, tag = 'scoped memory for tpu_custom_call.1']
    %26 = vsyncpa [#allocation3], 0
    %s27 = scalar_lea.sflag [#allocation3], 1
    %28 = vsyncpa %s27, 0
    loop: start=0, step=1, limit=4
    $region2: #{tpu_custom_call.1} parent=1 // loop_pre_header
      _
    $region3: #{tpu_custom_call.1} parent=1 // loop_header
      %s30 = sphi 0, %s34
      %p31 = scmp.ge.s32.totalorder %s30, 4
      %s40 = sphi 0, %s42
      %s43 = sphi 0, %s40
      %s44 = sphi 0, %s43
      %s60 = sphi 0, %s44
      %s64 = sphi 0, %s64
      %s66 = sphi 0, %s64
      %s67 = sphi 0, %s66
      %s81 = sphi 0, %s67
      %s85 = sphi 0, %s85
      %s87 = sphi 0, %s85
      %s88 = sphi 0, %s87
      %s102 = sphi 0, %s88
      %s106 = sphi 0, %s106
      %s108 = sphi 0, %s106
      %s109 = sphi 0, %s108
      %s123 = sphi 0, %s109
      %s127 = sphi 0, %s127
      %s129 = sphi 0, %s127
      %s130 = sphi 0, %s129
      %s144 = sphi 0, %s130
      %s148 = sphi 0, %s148
      %s150 = sphi 0, %s148
      %s151 = sphi 0, %s150
      %s165 = sphi 0, %s151
      %s169 = sphi 0, %s169
      %s171 = sphi 0, %s169
      %s172 = sphi 0, %s171
      %s186 = sphi 0, %s172
      %s190 = sphi 0, %s190
      %s192 = sphi 0, %s190
      %s193 = sphi 0, %s192
      %s207 = sphi 0, %s193
      %s211 = sphi 0, %s211
      %s213 = sphi 0, %s211
      %s214 = sphi 0, %s213
      %s228 = sphi 0, %s214
      %s232 = sphi 0, %s232
      %s234 = sphi 0, %s232
      %s235 = sphi 0, %s234
      %s249 = sphi 0, %s235
      %s253 = sphi 0, %s253
      %s255 = sphi 0, %s253
      %s256 = sphi 0, %s255
      %s270 = sphi 0, %s256
      %s274 = sphi 0, %s274
      %s276 = sphi 0, %s274
      %s277 = sphi 0, %s276
      %s291 = sphi 0, %s277
      %s295 = sphi 0, %s295
      %s297 = sphi 0, %s295
      %s298 = sphi 0, %s297
      %s312 = sphi 0, %s298
      %s316 = sphi 0, %s316
      %s318 = sphi 0, %s316
      %s319 = sphi 0, %s318
      %s333 = sphi 0, %s319
      %s337 = sphi 0, %s337
      %s339 = sphi 0, %s337
      %s340 = sphi 0, %s339
      %s354 = sphi 0, %s340
      %s358 = sphi 0, %s358
      %s360 = sphi 0, %s358
      %s361 = sphi 0, %s360
      %s375 = sphi 0, %s361
      %s379 = sphi 0, %s379
      %s381 = sphi 0, %s379
      %s382 = sphi 0, %s381
      %s396 = sphi 0, %s382
      %s400 = sphi 0, %s400
      %s402 = sphi 0, %s400
      %s403 = sphi 0, %s402
      %s417 = sphi 0, %s403
      %s421 = sphi 0, %s421
      %s423 = sphi 0, %s421
      %s424 = sphi 0, %s423
      %s438 = sphi 0, %s424
      %s442 = sphi 0, %s442
      %s444 = sphi 0, %s442
      %s445 = sphi 0, %s444
      %s459 = sphi 0, %s445
      %s463 = sphi 0, %s463
      %s465 = sphi 0, %s463
      %s466 = sphi 0, %s465
      %s480 = sphi 0, %s466
      %s486 = sphi 0, %s488
      %s489 = sphi 0, %s486
      %s490 = sphi 0, %s489
      %s506 = sphi 0, %s490
    $region4: #{tpu_custom_call.1} parent=1 // loop_header_branch
      %33 = sbr.rel (%p31) target = $region8
    $region5: #{tpu_custom_call.1} parent=1 // loop_body
      %s35 = ssub.s32 %s30, 1
      %s36 = ssub.s32 %s30, 2
      %s37 = sadd.s32 %s30, 1
      %s38 = ssub.s32 %s30, %s37
      %p39 = scmp.eq.s32.totalorder %s38, 0
      %s41 = sadd.s32 %s40, 1
      %s42 = scalar_select %p39, %s40, %s41
      %p45 = pneg %p39
      %p46 = scmp.eq.s32.totalorder %s30, 1
      %p47 = por %p45, %p46
      %p48 = scmp.ne.s32.totalorder %s40, %s43
      %p49 = scmp.eq.s32.totalorder %s30, 0
      %p50 = por %p48, %p49
      %p51 = scmp.ne.s32.totalorder %s40, %s43
      %p52 = scmp.eq.s32.totalorder %s35, 1
      %p53 = por %p51, %p52
      %p54 = scmp.ne.s32.totalorder %s43, %s44
      %p55 = scmp.eq.s32.totalorder %s35, 0
      %p56 = por %p54, %p55
      %p57 = scmp.ne.s32.totalorder %s43, %s44
      %p58 = scmp.eq.s32.totalorder %s36, 1
      %p59 = por %p57, %p58
      %p61 = scmp.ne.s32.totalorder %s44, %s60
      %p62 = scmp.eq.s32.totalorder %s36, 0
      %p63 = por %p61, %p62
      %s65 = sadd.s32 %s64, 1
      %p68 = scmp.eq.s32.totalorder %s30, 1
      %p69 = scmp.ne.s32.totalorder %s64, %s66
      %p70 = scmp.eq.s32.totalorder %s30, 0
      %p71 = por %p69, %p70
      %p72 = scmp.ne.s32.totalorder %s64, %s66
      %p73 = scmp.eq.s32.totalorder %s35, 1
      %p74 = por %p72, %p73
      %p75 = scmp.ne.s32.totalorder %s66, %s67
      %p76 = scmp.eq.s32.totalorder %s35, 0
      %p77 = por %p75, %p76
      %p78 = scmp.ne.s32.totalorder %s66, %s67
      %p79 = scmp.eq.s32.totalorder %s36, 1
      %p80 = por %p78, %p79
      %p82 = scmp.ne.s32.totalorder %s67, %s81
      %p83 = scmp.eq.s32.totalorder %s36, 0
      %p84 = por %p82, %p83
      %s86 = sadd.s32 %s85, 1
      %p89 = scmp.eq.s32.totalorder %s30, 1
      %p90 = scmp.ne.s32.totalorder %s85, %s87
      %p91 = scmp.eq.s32.totalorder %s30, 0
      %p92 = por %p90, %p91
      %p93 = scmp.ne.s32.totalorder %s85, %s87
      %p94 = scmp.eq.s32.totalorder %s35, 1
      %p95 = por %p93, %p94
      %p96 = scmp.ne.s32.totalorder %s87, %s88
      %p97 = scmp.eq.s32.totalorder %s35, 0
      %p98 = por %p96, %p97
      %p99 = scmp.ne.s32.totalorder %s87, %s88
      %p100 = scmp.eq.s32.totalorder %s36, 1
      %p101 = por %p99, %p100
      %p103 = scmp.ne.s32.totalorder %s88, %s102
      %p104 = scmp.eq.s32.totalorder %s36, 0
      %p105 = por %p103, %p104
      %s107 = sadd.s32 %s106, 1
      %p110 = scmp.eq.s32.totalorder %s30, 1
      %p111 = scmp.ne.s32.totalorder %s106, %s108
      %p112 = scmp.eq.s32.totalorder %s30, 0
      %p113 = por %p111, %p112
      %p114 = scmp.ne.s32.totalorder %s106, %s108
      %p115 = scmp.eq.s32.totalorder %s35, 1
      %p116 = por %p114, %p115
      %p117 = scmp.ne.s32.totalorder %s108, %s109
      %p118 = scmp.eq.s32.totalorder %s35, 0
      %p119 = por %p117, %p118
      %p120 = scmp.ne.s32.totalorder %s108, %s109
      %p121 = scmp.eq.s32.totalorder %s36, 1
      %p122 = por %p120, %p121
      %p124 = scmp.ne.s32.totalorder %s109, %s123
      %p125 = scmp.eq.s32.totalorder %s36, 0
      %p126 = por %p124, %p125
      %s128 = sadd.s32 %s127, 1
      %p131 = scmp.eq.s32.totalorder %s30, 1
      %p132 = scmp.ne.s32.totalorder %s127, %s129
      %p133 = scmp.eq.s32.totalorder %s30, 0
      %p134 = por %p132, %p133
      %p135 = scmp.ne.s32.totalorder %s127, %s129
      %p136 = scmp.eq.s32.totalorder %s35, 1
      %p137 = por %p135, %p136
      %p138 = scmp.ne.s32.totalorder %s129, %s130
      %p139 = scmp.eq.s32.totalorder %s35, 0
      %p140 = por %p138, %p139
      %p141 = scmp.ne.s32.totalorder %s129, %s130
      %p142 = scmp.eq.s32.totalorder %s36, 1
      %p143 = por %p141, %p142
      %p145 = scmp.ne.s32.totalorder %s130, %s144
      %p146 = scmp.eq.s32.totalorder %s36, 0
      %p147 = por %p145, %p146
      %s149 = sadd.s32 %s148, 1
      %p152 = scmp.eq.s32.totalorder %s30, 1
      %p153 = scmp.ne.s32.totalorder %s148, %s150
      %p154 = scmp.eq.s32.totalorder %s30, 0
      %p155 = por %p153, %p154
      %p156 = scmp.ne.s32.totalorder %s148, %s150
      %p157 = scmp.eq.s32.totalorder %s35, 1
      %p158 = por %p156, %p157
      %p159 = scmp.ne.s32.totalorder %s150, %s151
      %p160 = scmp.eq.s32.totalorder %s35, 0
      %p161 = por %p159, %p160
      %p162 = scmp.ne.s32.totalorder %s150, %s151
      %p163 = scmp.eq.s32.totalorder %s36, 1
      %p164 = por %p162, %p163
      %p166 = scmp.ne.s32.totalorder %s151, %s165
      %p167 = scmp.eq.s32.totalorder %s36, 0
      %p168 = por %p166, %p167
      %s170 = sadd.s32 %s169, 1
      %p173 = scmp.eq.s32.totalorder %s30, 1
      %p174 = scmp.ne.s32.totalorder %s169, %s171
      %p175 = scmp.eq.s32.totalorder %s30, 0
      %p176 = por %p174, %p175
      %p177 = scmp.ne.s32.totalorder %s169, %s171
      %p178 = scmp.eq.s32.totalorder %s35, 1
      %p179 = por %p177, %p178
      %p180 = scmp.ne.s32.totalorder %s171, %s172
      %p181 = scmp.eq.s32.totalorder %s35, 0
      %p182 = por %p180, %p181
      %p183 = scmp.ne.s32.totalorder %s171, %s172
      %p184 = scmp.eq.s32.totalorder %s36, 1
      %p185 = por %p183, %p184
      %p187 = scmp.ne.s32.totalorder %s172, %s186
      %p188 = scmp.eq.s32.totalorder %s36, 0
      %p189 = por %p187, %p188
      %s191 = sadd.s32 %s190, 1
      %p194 = scmp.eq.s32.totalorder %s30, 1
      %p195 = scmp.ne.s32.totalorder %s190, %s192
      %p196 = scmp.eq.s32.totalorder %s30, 0
      %p197 = por %p195, %p196
      %p198 = scmp.ne.s32.totalorder %s190, %s192
      %p199 = scmp.eq.s32.totalorder %s35, 1
      %p200 = por %p198, %p199
      %p201 = scmp.ne.s32.totalorder %s192, %s193
      %p202 = scmp.eq.s32.totalorder %s35, 0
      %p203 = por %p201, %p202
      %p204 = scmp.ne.s32.totalorder %s192, %s193
      %p205 = scmp.eq.s32.totalorder %s36, 1
      %p206 = por %p204, %p205
      %p208 = scmp.ne.s32.totalorder %s193, %s207
      %p209 = scmp.eq.s32.totalorder %s36, 0
      %p210 = por %p208, %p209
      %s212 = sadd.s32 %s211, 1
      %p215 = scmp.eq.s32.totalorder %s30, 1
      %p216 = scmp.ne.s32.totalorder %s211, %s213
      %p217 = scmp.eq.s32.totalorder %s30, 0
      %p218 = por %p216, %p217
      %p219 = scmp.ne.s32.totalorder %s211, %s213
      %p220 = scmp.eq.s32.totalorder %s35, 1
      %p221 = por %p219, %p220
      %p222 = scmp.ne.s32.totalorder %s213, %s214
      %p223 = scmp.eq.s32.totalorder %s35, 0
      %p224 = por %p222, %p223
      %p225 = scmp.ne.s32.totalorder %s213, %s214
      %p226 = scmp.eq.s32.totalorder %s36, 1
      %p227 = por %p225, %p226
      %p229 = scmp.ne.s32.totalorder %s214, %s228
      %p230 = scmp.eq.s32.totalorder %s36, 0
      %p231 = por %p229, %p230
      %s233 = sadd.s32 %s232, 1
      %p236 = scmp.eq.s32.totalorder %s30, 1
      %p237 = scmp.ne.s32.totalorder %s232, %s234
      %p238 = scmp.eq.s32.totalorder %s30, 0
      %p239 = por %p237, %p238
      %p240 = scmp.ne.s32.totalorder %s232, %s234
      %p241 = scmp.eq.s32.totalorder %s35, 1
      %p242 = por %p240, %p241
      %p243 = scmp.ne.s32.totalorder %s234, %s235
      %p244 = scmp.eq.s32.totalorder %s35, 0
      %p245 = por %p243, %p244
      %p246 = scmp.ne.s32.totalorder %s234, %s235
      %p247 = scmp.eq.s32.totalorder %s36, 1
      %p248 = por %p246, %p247
      %p250 = scmp.ne.s32.totalorder %s235, %s249
      %p251 = scmp.eq.s32.totalorder %s36, 0
      %p252 = por %p250, %p251
      %s254 = sadd.s32 %s253, 1
      %p257 = scmp.eq.s32.totalorder %s30, 1
      %p258 = scmp.ne.s32.totalorder %s253, %s255
      %p259 = scmp.eq.s32.totalorder %s30, 0
      %p260 = por %p258, %p259
      %p261 = scmp.ne.s32.totalorder %s253, %s255
      %p262 = scmp.eq.s32.totalorder %s35, 1
      %p263 = por %p261, %p262
      %p264 = scmp.ne.s32.totalorder %s255, %s256
      %p265 = scmp.eq.s32.totalorder %s35, 0
      %p266 = por %p264, %p265
      %p267 = scmp.ne.s32.totalorder %s255, %s256
      %p268 = scmp.eq.s32.totalorder %s36, 1
      %p269 = por %p267, %p268
      %p271 = scmp.ne.s32.totalorder %s256, %s270
      %p272 = scmp.eq.s32.totalorder %s36, 0
      %p273 = por %p271, %p272
      %s275 = sadd.s32 %s274, 1
      %p278 = scmp.eq.s32.totalorder %s30, 1
      %p279 = scmp.ne.s32.totalorder %s274, %s276
      %p280 = scmp.eq.s32.totalorder %s30, 0
      %p281 = por %p279, %p280
      %p282 = scmp.ne.s32.totalorder %s274, %s276
      %p283 = scmp.eq.s32.totalorder %s35, 1
      %p284 = por %p282, %p283
      %p285 = scmp.ne.s32.totalorder %s276, %s277
      %p286 = scmp.eq.s32.totalorder %s35, 0
      %p287 = por %p285, %p286
      %p288 = scmp.ne.s32.totalorder %s276, %s277
      %p289 = scmp.eq.s32.totalorder %s36, 1
      %p290 = por %p288, %p289
      %p292 = scmp.ne.s32.totalorder %s277, %s291
      %p293 = scmp.eq.s32.totalorder %s36, 0
      %p294 = por %p292, %p293
      %s296 = sadd.s32 %s295, 1
      %p299 = scmp.eq.s32.totalorder %s30, 1
      %p300 = scmp.ne.s32.totalorder %s295, %s297
      %p301 = scmp.eq.s32.totalorder %s30, 0
      %p302 = por %p300, %p301
      %p303 = scmp.ne.s32.totalorder %s295, %s297
      %p304 = scmp.eq.s32.totalorder %s35, 1
      %p305 = por %p303, %p304
      %p306 = scmp.ne.s32.totalorder %s297, %s298
      %p307 = scmp.eq.s32.totalorder %s35, 0
      %p308 = por %p306, %p307
      %p309 = scmp.ne.s32.totalorder %s297, %s298
      %p310 = scmp.eq.s32.totalorder %s36, 1
      %p311 = por %p309, %p310
      %p313 = scmp.ne.s32.totalorder %s298, %s312
      %p314 = scmp.eq.s32.totalorder %s36, 0
      %p315 = por %p313, %p314
      %s317 = sadd.s32 %s316, 1
      %p320 = scmp.eq.s32.totalorder %s30, 1
      %p321 = scmp.ne.s32.totalorder %s316, %s318
      %p322 = scmp.eq.s32.totalorder %s30, 0
      %p323 = por %p321, %p322
      %p324 = scmp.ne.s32.totalorder %s316, %s318
      %p325 = scmp.eq.s32.totalorder %s35, 1
      %p326 = por %p324, %p325
      %p327 = scmp.ne.s32.totalorder %s318, %s319
      %p328 = scmp.eq.s32.totalorder %s35, 0
      %p329 = por %p327, %p328
      %p330 = scmp.ne.s32.totalorder %s318, %s319
      %p331 = scmp.eq.s32.totalorder %s36, 1
      %p332 = por %p330, %p331
      %p334 = scmp.ne.s32.totalorder %s319, %s333
      %p335 = scmp.eq.s32.totalorder %s36, 0
      %p336 = por %p334, %p335
      %s338 = sadd.s32 %s337, 1
      %p341 = scmp.eq.s32.totalorder %s30, 1
      %p342 = scmp.ne.s32.totalorder %s337, %s339
      %p343 = scmp.eq.s32.totalorder %s30, 0
      %p344 = por %p342, %p343
      %p345 = scmp.ne.s32.totalorder %s337, %s339
      %p346 = scmp.eq.s32.totalorder %s35, 1
      %p347 = por %p345, %p346
      %p348 = scmp.ne.s32.totalorder %s339, %s340
      %p349 = scmp.eq.s32.totalorder %s35, 0
      %p350 = por %p348, %p349
      %p351 = scmp.ne.s32.totalorder %s339, %s340
      %p352 = scmp.eq.s32.totalorder %s36, 1
      %p353 = por %p351, %p352
      %p355 = scmp.ne.s32.totalorder %s340, %s354
      %p356 = scmp.eq.s32.totalorder %s36, 0
      %p357 = por %p355, %p356
      %s359 = sadd.s32 %s358, 1
      %p362 = scmp.eq.s32.totalorder %s30, 1
      %p363 = scmp.ne.s32.totalorder %s358, %s360
      %p364 = scmp.eq.s32.totalorder %s30, 0
      %p365 = por %p363, %p364
      %p366 = scmp.ne.s32.totalorder %s358, %s360
      %p367 = scmp.eq.s32.totalorder %s35, 1
      %p368 = por %p366, %p367
      %p369 = scmp.ne.s32.totalorder %s360, %s361
      %p370 = scmp.eq.s32.totalorder %s35, 0
      %p371 = por %p369, %p370
      %p372 = scmp.ne.s32.totalorder %s360, %s361
      %p373 = scmp.eq.s32.totalorder %s36, 1
      %p374 = por %p372, %p373
      %p376 = scmp.ne.s32.totalorder %s361, %s375
      %p377 = scmp.eq.s32.totalorder %s36, 0
      %p378 = por %p376, %p377
      %s380 = sadd.s32 %s379, 1
      %p383 = scmp.eq.s32.totalorder %s30, 1
      %p384 = scmp.ne.s32.totalorder %s379, %s381
      %p385 = scmp.eq.s32.totalorder %s30, 0
      %p386 = por %p384, %p385
      %p387 = scmp.ne.s32.totalorder %s379, %s381
      %p388 = scmp.eq.s32.totalorder %s35, 1
      %p389 = por %p387, %p388
      %p390 = scmp.ne.s32.totalorder %s381, %s382
      %p391 = scmp.eq.s32.totalorder %s35, 0
      %p392 = por %p390, %p391
      %p393 = scmp.ne.s32.totalorder %s381, %s382
      %p394 = scmp.eq.s32.totalorder %s36, 1
      %p395 = por %p393, %p394
      %p397 = scmp.ne.s32.totalorder %s382, %s396
      %p398 = scmp.eq.s32.totalorder %s36, 0
      %p399 = por %p397, %p398
      %s401 = sadd.s32 %s400, 1
      %p404 = scmp.eq.s32.totalorder %s30, 1
      %p405 = scmp.ne.s32.totalorder %s400, %s402
      %p406 = scmp.eq.s32.totalorder %s30, 0
      %p407 = por %p405, %p406
      %p408 = scmp.ne.s32.totalorder %s400, %s402
      %p409 = scmp.eq.s32.totalorder %s35, 1
      %p410 = por %p408, %p409
      %p411 = scmp.ne.s32.totalorder %s402, %s403
      %p412 = scmp.eq.s32.totalorder %s35, 0
      %p413 = por %p411, %p412
      %p414 = scmp.ne.s32.totalorder %s402, %s403
      %p415 = scmp.eq.s32.totalorder %s36, 1
      %p416 = por %p414, %p415
      %p418 = scmp.ne.s32.totalorder %s403, %s417
      %p419 = scmp.eq.s32.totalorder %s36, 0
      %p420 = por %p418, %p419
      %s422 = sadd.s32 %s421, 1
      %p425 = scmp.eq.s32.totalorder %s30, 1
      %p426 = scmp.ne.s32.totalorder %s421, %s423
      %p427 = scmp.eq.s32.totalorder %s30, 0
      %p428 = por %p426, %p427
      %p429 = scmp.ne.s32.totalorder %s421, %s423
      %p430 = scmp.eq.s32.totalorder %s35, 1
      %p431 = por %p429, %p430
      %p432 = scmp.ne.s32.totalorder %s423, %s424
      %p433 = scmp.eq.s32.totalorder %s35, 0
      %p434 = por %p432, %p433
      %p435 = scmp.ne.s32.totalorder %s423, %s424
      %p436 = scmp.eq.s32.totalorder %s36, 1
      %p437 = por %p435, %p436
      %p439 = scmp.ne.s32.totalorder %s424, %s438
      %p440 = scmp.eq.s32.totalorder %s36, 0
      %p441 = por %p439, %p440
      %s443 = sadd.s32 %s442, 1
      %p446 = scmp.eq.s32.totalorder %s30, 1
      %p447 = scmp.ne.s32.totalorder %s442, %s444
      %p448 = scmp.eq.s32.totalorder %s30, 0
      %p449 = por %p447, %p448
      %p450 = scmp.ne.s32.totalorder %s442, %s444
      %p451 = scmp.eq.s32.totalorder %s35, 1
      %p452 = por %p450, %p451
      %p453 = scmp.ne.s32.totalorder %s444, %s445
      %p454 = scmp.eq.s32.totalorder %s35, 0
      %p455 = por %p453, %p454
      %p456 = scmp.ne.s32.totalorder %s444, %s445
      %p457 = scmp.eq.s32.totalorder %s36, 1
      %p458 = por %p456, %p457
      %p460 = scmp.ne.s32.totalorder %s445, %s459
      %p461 = scmp.eq.s32.totalorder %s36, 0
      %p462 = por %p460, %p461
      %s464 = sadd.s32 %s463, 1
      %p467 = scmp.eq.s32.totalorder %s30, 1
      %p468 = scmp.ne.s32.totalorder %s463, %s465
      %p469 = scmp.eq.s32.totalorder %s30, 0
      %p470 = por %p468, %p469
      %p471 = scmp.ne.s32.totalorder %s463, %s465
      %p472 = scmp.eq.s32.totalorder %s35, 1
      %p473 = por %p471, %p472
      %p474 = scmp.ne.s32.totalorder %s465, %s466
      %p475 = scmp.eq.s32.totalorder %s35, 0
      %p476 = por %p474, %p475
      %p477 = scmp.ne.s32.totalorder %s465, %s466
      %p478 = scmp.eq.s32.totalorder %s36, 1
      %p479 = por %p477, %p478
      %p481 = scmp.ne.s32.totalorder %s466, %s480
      %p482 = scmp.eq.s32.totalorder %s36, 0
      %p483 = por %p481, %p482
      %s484 = ssub.s32 %s30, %s37
      %p485 = scmp.eq.s32.totalorder %s484, 0
      %s487 = sadd.s32 %s486, 1
      %s488 = scalar_select %p485, %s486, %s487
      %p491 = pneg %p485
      %p492 = scmp.eq.s32.totalorder %s30, 1
      %p493 = por %p491, %p492
      %p494 = scmp.ne.s32.totalorder %s486, %s489
      %p495 = scmp.eq.s32.totalorder %s30, 0
      %p496 = por %p494, %p495
      %p497 = scmp.ne.s32.totalorder %s486, %s489
      %p498 = scmp.eq.s32.totalorder %s35, 1
      %p499 = por %p497, %p498
      %p500 = scmp.ne.s32.totalorder %s489, %s490
      %p501 = scmp.eq.s32.totalorder %s35, 0
      %p502 = por %p500, %p501
      %p503 = scmp.ne.s32.totalorder %s489, %s490
      %p504 = scmp.eq.s32.totalorder %s36, 1
      %p505 = por %p503, %p504
      %p507 = scmp.ne.s32.totalorder %s490, %s506
      %p508 = scmp.eq.s32.totalorder %s36, 0
      %p509 = por %p507, %p508
      %p510 = scmp.le.s32.totalorder 1, %s30
      %p511 = scmp.lt.s32.totalorder %s30, 3
      %p512 = pnand %p510, %p511
      %p513 = pneg %p512
      // Predicated region
      $region9: #{tpu_custom_call.1} parent=5 // pred_check
        _
      $region10: #{tpu_custom_call.1} parent=5 // pred_check_branch
        %515 = sbr.rel (%p512) target = $region12
      $region11: #{tpu_custom_call.1} parent=5 // pred_region
        %s516 = ssub.s32 %s30, 1
        // Predicated region
        $region13: #{tpu_custom_call.1} parent=11 // pred_check
          %p517 = pneg %p77
        $region14: #{tpu_custom_call.1} parent=11 // pred_check_branch
          %519 = sbr.rel (%p517) target = $region16
        $region15: #{tpu_custom_call.1} parent=11 // pred_region
          _
        $region16: #{tpu_custom_call.1} parent=11 // pred_fallthru
          _
        // Predicated region
        $region17: #{tpu_custom_call.1} parent=11 // pred_check
          %p520 = pneg %p98
        $region18: #{tpu_custom_call.1} parent=11 // pred_check_branch
          %522 = sbr.rel (%p520) target = $region20
        $region19: #{tpu_custom_call.1} parent=11 // pred_region
          _
        $region20: #{tpu_custom_call.1} parent=11 // pred_fallthru
          _
        // Predicated region
        $region21: #{tpu_custom_call.1} parent=11 // pred_check
          %p523 = pneg %p119
        $region22: #{tpu_custom_call.1} parent=11 // pred_check_branch
          %525 = sbr.rel (%p523) target = $region24
        $region23: #{tpu_custom_call.1} parent=11 // pred_region
          _
        $region24: #{tpu_custom_call.1} parent=11 // pred_fallthru
          _
        // Predicated region
        $region25: #{tpu_custom_call.1} parent=11 // pred_check
          %p526 = pneg %p140
        $region26: #{tpu_custom_call.1} parent=11 // pred_check_branch
          %528 = sbr.rel (%p526) target = $region28
        $region27: #{tpu_custom_call.1} parent=11 // pred_region
          _
        $region28: #{tpu_custom_call.1} parent=11 // pred_fallthru
          _
        // Predicated region
        $region29: #{tpu_custom_call.1} parent=11 // pred_check
          %p529 = pneg %p161
        $region30: #{tpu_custom_call.1} parent=11 // pred_check_branch
          %531 = sbr.rel (%p529) target = $region32
        $region31: #{tpu_custom_call.1} parent=11 // pred_region
          _
        $region32: #{tpu_custom_call.1} parent=11 // pred_fallthru
          _
        // Predicated region
        $region33: #{tpu_custom_call.1} parent=11 // pred_check
          %p532 = pneg %p182
        $region34: #{tpu_custom_call.1} parent=11 // pred_check_branch
          %534 = sbr.rel (%p532) target = $region36
        $region35: #{tpu_custom_call.1} parent=11 // pred_region
          _
        $region36: #{tpu_custom_call.1} parent=11 // pred_fallthru
          _
        // Predicated region
        $region37: #{tpu_custom_call.1} parent=11 // pred_check
          %p535 = pneg %p203
        $region38: #{tpu_custom_call.1} parent=11 // pred_check_branch
          %537 = sbr.rel (%p535) target = $region40
        $region39: #{tpu_custom_call.1} parent=11 // pred_region
          _
        $region40: #{tpu_custom_call.1} parent=11 // pred_fallthru
          _
        // Predicated region
        $region41: #{tpu_custom_call.1} parent=11 // pred_check
          %p538 = pneg %p224
        $region42: #{tpu_custom_call.1} parent=11 // pred_check_branch
          %540 = sbr.rel (%p538) target = $region44
        $region43: #{tpu_custom_call.1} parent=11 // pred_region
          _
        $region44: #{tpu_custom_call.1} parent=11 // pred_fallthru
          _
        // Predicated region
        $region45: #{tpu_custom_call.1} parent=11 // pred_check
          %p541 = pneg %p245
        $region46: #{tpu_custom_call.1} parent=11 // pred_check_branch
          %543 = sbr.rel (%p541) target = $region48
        $region47: #{tpu_custom_call.1} parent=11 // pred_region
          _
        $region48: #{tpu_custom_call.1} parent=11 // pred_fallthru
          _
        // Predicated region
        $region49: #{tpu_custom_call.1} parent=11 // pred_check
          %p544 = pneg %p266
        $region50: #{tpu_custom_call.1} parent=11 // pred_check_branch
          %546 = sbr.rel (%p544) target = $region52
        $region51: #{tpu_custom_call.1} parent=11 // pred_region
          _
        $region52: #{tpu_custom_call.1} parent=11 // pred_fallthru
          _
        // Predicated region
        $region53: #{tpu_custom_call.1} parent=11 // pred_check
          %p547 = pneg %p287
        $region54: #{tpu_custom_call.1} parent=11 // pred_check_branch
          %549 = sbr.rel (%p547) target = $region56
        $region55: #{tpu_custom_call.1} parent=11 // pred_region
          _
        $region56: #{tpu_custom_call.1} parent=11 // pred_fallthru
          _
        // Predicated region
        $region57: #{tpu_custom_call.1} parent=11 // pred_check
          %p550 = pneg %p308
        $region58: #{tpu_custom_call.1} parent=11 // pred_check_branch
          %552 = sbr.rel (%p550) target = $region60
        $region59: #{tpu_custom_call.1} parent=11 // pred_region
          _
        $region60: #{tpu_custom_call.1} parent=11 // pred_fallthru
          _
        // Predicated region
        $region61: #{tpu_custom_call.1} parent=11 // pred_check
          %p553 = pneg %p329
        $region62: #{tpu_custom_call.1} parent=11 // pred_check_branch
          %555 = sbr.rel (%p553) target = $region64
        $region63: #{tpu_custom_call.1} parent=11 // pred_region
          _
        $region64: #{tpu_custom_call.1} parent=11 // pred_fallthru
          _
        // Predicated region
        $region65: #{tpu_custom_call.1} parent=11 // pred_check
          %p556 = pneg %p350
        $region66: #{tpu_custom_call.1} parent=11 // pred_check_branch
          %558 = sbr.rel (%p556) target = $region68
        $region67: #{tpu_custom_call.1} parent=11 // pred_region
          _
        $region68: #{tpu_custom_call.1} parent=11 // pred_fallthru
          _
        // Predicated region
        $region69: #{tpu_custom_call.1} parent=11 // pred_check
          %p559 = pneg %p371
        $region70: #{tpu_custom_call.1} parent=11 // pred_check_branch
          %561 = sbr.rel (%p559) target = $region72
        $region71: #{tpu_custom_call.1} parent=11 // pred_region
          _
        $region72: #{tpu_custom_call.1} parent=11 // pred_fallthru
          _
        // Predicated region
        $region73: #{tpu_custom_call.1} parent=11 // pred_check
          %p562 = pneg %p392
        $region74: #{tpu_custom_call.1} parent=11 // pred_check_branch
          %564 = sbr.rel (%p562) target = $region76
        $region75: #{tpu_custom_call.1} parent=11 // pred_region
          _
        $region76: #{tpu_custom_call.1} parent=11 // pred_fallthru
          _
        // Predicated region
        $region77: #{tpu_custom_call.1} parent=11 // pred_check
          %p565 = pneg %p413
        $region78: #{tpu_custom_call.1} parent=11 // pred_check_branch
          %567 = sbr.rel (%p565) target = $region80
        $region79: #{tpu_custom_call.1} parent=11 // pred_region
          _
        $region80: #{tpu_custom_call.1} parent=11 // pred_fallthru
          _
        // Predicated region
        $region81: #{tpu_custom_call.1} parent=11 // pred_check
          %p568 = pneg %p434
        $region82: #{tpu_custom_call.1} parent=11 // pred_check_branch
          %570 = sbr.rel (%p568) target = $region84
        $region83: #{tpu_custom_call.1} parent=11 // pred_region
          _
        $region84: #{tpu_custom_call.1} parent=11 // pred_fallthru
          _
        // Predicated region
        $region85: #{tpu_custom_call.1} parent=11 // pred_check
          %p571 = pneg %p455
        $region86: #{tpu_custom_call.1} parent=11 // pred_check_branch
          %573 = sbr.rel (%p571) target = $region88
        $region87: #{tpu_custom_call.1} parent=11 // pred_region
          _
        $region88: #{tpu_custom_call.1} parent=11 // pred_fallthru
          _
        // Predicated region
        $region89: #{tpu_custom_call.1} parent=11 // pred_check
          %p574 = pneg %p476
        $region90: #{tpu_custom_call.1} parent=11 // pred_check_branch
          %576 = sbr.rel (%p574) target = $region92
        $region91: #{tpu_custom_call.1} parent=11 // pred_region
          _
        $region92: #{tpu_custom_call.1} parent=11 // pred_fallthru
          _
      $region12: #{tpu_custom_call.1} parent=5 // pred_fallthru
        _
      %p577 = scmp.lt.s32.totalorder %s30, 2
      // Predicated region
      $region93: #{tpu_custom_call.1} parent=5 // pred_check
        %p578 = pneg %p577
      $region94: #{tpu_custom_call.1} parent=5 // pred_check_branch
        %580 = sbr.rel (%p578) target = $region96
      $region95: #{tpu_custom_call.1} parent=5 // pred_region
        // Predicated region
        $region97: #{tpu_custom_call.1} parent=95 // pred_check
          %p581 = pneg %p50
        $region98: #{tpu_custom_call.1} parent=95 // pred_check_branch
          %583 = sbr.rel (%p581) target = $region100
        $region99: #{tpu_custom_call.1} parent=95 // pred_region
          %p584 = scmp.lt.s32.totalorder %s30, 1
          %s585 = scalar_select %p584, %s30, 1
          %s586 = smul.addr %s585, 8
          %s587 = scalar_lea.vmem %s0, %s586
        $region100: #{tpu_custom_call.1} parent=95 // pred_fallthru
          _
      $region96: #{tpu_custom_call.1} parent=5 // pred_fallthru
        _
      %p588 = scmp.le.s32.totalorder 1, %s30
      %p589 = scmp.lt.s32.totalorder %s30, 3
      %p590 = pnand %p588, %p589
      %p591 = pneg %p590
      // Predicated region
      $region101: #{tpu_custom_call.1} parent=5 // pred_check
        _
      $region102: #{tpu_custom_call.1} parent=5 // pred_check_branch
        %593 = sbr.rel (%p590) target = $region104
      $region103: #{tpu_custom_call.1} parent=5 // pred_region
        %s594 = ssub.s32 %s30, 1
        %p595 = scmp.lt.s32.totalorder %s35, 1
        %s596 = scalar_select %p595, %s35, 1
        %s597 = smul.addr %s596, 8
        %s598 = scalar_lea.vmem %s0, %s597
        %p599 = pneg %p56
        %p600 = pneg %p53
        %p601 = pneg %p77
        %p602 = pneg %p74
        %p603 = pneg %p98
        %p604 = pneg %p95
        %p605 = pneg %p119
        %p606 = pneg %p116
        %p607 = pneg %p140
        %p608 = pneg %p137
        %p609 = pneg %p161
        %p610 = pneg %p158
        %p611 = pneg %p182
        %p612 = pneg %p179
        %p613 = pneg %p203
        %p614 = pneg %p200
        %p615 = pneg %p224
        %p616 = pneg %p221
        %p617 = pneg %p245
        %p618 = pneg %p242
        %p619 = pneg %p266
        %p620 = pneg %p263
        %p621 = pneg %p287
        %p622 = pneg %p284
        %p623 = pneg %p308
        %p624 = pneg %p305
        %p625 = pneg %p329
        %p626 = pneg %p326
        %p627 = pneg %p350
        %p628 = pneg %p347
        %p629 = pneg %p371
        %p630 = pneg %p368
        %p631 = pneg %p392
        %p632 = pneg %p389
        %p633 = pneg %p413
        %p634 = pneg %p410
        %p635 = pneg %p434
        %p636 = pneg %p431
        %p637 = pneg %p455
        %p638 = pneg %p452
        %p639 = pneg %p476
        %p640 = pneg %p473
        %p641 = pneg %p502
        %p642 = pneg %p499
        %s643 = sand.u32 %s489, 1
        %s644 = scalar_lea.sflag [#allocation3], %s643
        %s645 = sand.u32 %s489, 1
        %s646 = smul.addr %s645, 8
        %s647 = scalar_lea.vmem [#allocation2], %s646
        %p648 = scmp.lt.s32.totalorder %s35, 1
        %s649 = scalar_select %p648, %s35, 1
        %s650 = smul.addr %s649, 8
        %s651 = scalar_lea.vmem %s0, %s650
        %v652 = vld [vmem:[%s651] sm:$0xff]
        %v654 = vrot.slane %v652, 1
        %655 = vrot.lane.b32.xlu0 %v654, 32
        %v656 = vpop.permute.xlu0 %655
        %v658 = vrot.slane %v652, 2
        %659 = vrot.lane.b32.xlu0 %v658, 64
        %v660 = vpop.permute.xlu0 %659
        %vm662 = vcmask 261120
        %v663 = vsel %vm662, %v652, %v656
        %vm664 = vcmask 523264
        %v665 = vsel %vm664, %v663, %v660
        %v666 = vld [vmem:[%s1] sm:$0xff]
        %v667 = vld [vmem:[%s1 + $0x8] sm:$0xff]
        %v668 = vld [vmem:[%s1 + $0x10] sm:$0xff]
        %v669 = vld [vmem:[%s1 + $0x18] sm:$0xff]
        %v670 = vld [vmem:[%s1 + $0x20] sm:$0xff]
        %v671 = vld [vmem:[%s1 + $0x28] sm:$0xff]
        %v672 = vld [vmem:[%s1 + $0x30] sm:$0xff]
        %v673 = vld [vmem:[%s1 + $0x38] sm:$0xff]
        %v674 = vld [vmem:[%s1 + $0x40] sm:$0xff]
        %v675 = vld [vmem:[%s1 + $0x48] sm:$0xff]
        %v676 = vld [vmem:[%s1 + $0x50] sm:$0xff]
        %v677 = vld [vmem:[%s1 + $0x58] sm:$0xff]
        %v678 = vld [vmem:[%s2] sm:$0x1]
        %v680 = vperm.slane %v678, 0
        %vm682 = vcmask 785408
        %v684 = vsel %vm682, %v665, 0
        %686 = vmatpush.msra.mxu0 0.0
        %687 = vmatpush.msra.mxu0 0.0
        %688 = vmatpush.msra.mxu0 0.0
        %689 = vmatpush.msra.mxu0 0.0
        %690 = vmatpush.msra.mxu0 %v677
        %691 = vmatpush.msra.mxu0 %v676
        %692 = vmatpush.msra.mxu0 %v675
        %693 = vmatpush.msra.mxu0 %v674
        %694 = vmatpush.msra.mxu0 %v673
        %695 = vmatpush.msra.mxu0 %v672
        %696 = vmatpush.msra.mxu0 %v671
        %697 = vmatpush.msra.mxu0 %v670
        %698 = vmatpush.msra.mxu0 %v669
        %699 = vmatpush.msra.mxu0 %v668
        %700 = vmatpush.msra.mxu0 %v667
        %701 = vmatpush.msra.mxu0 %v666
        %702 = vmatmul.f32.gmra.mxu0 %v684
        %v703 = vpop.f32.mrf.mxu0
        %v704 = vadd.f32 %v680, %v703
        %705 = vdwg.mxu0
        %v706 = vmax.f32 %v704, 0.0
        %v707 = vld [vmem:[%s3] sm:$0x1]
        %v708 = vld [vmem:[%s4] sm:$0x1]
        %vm709 = vcmask 259072
        %v710 = vsel %vm709, %v706, 0.0
        %711 = vadd.xlane.f32.xlu0 %v710
        %v712 = vpop.xlane.xlu0 %711
        %v713 = vrcp.pop 32.0
        %v714 = vmul.f32 32.0, %v713
        %v715 = vsub.f32 1.0, %v714
        %v716 = vmul.f32 %v713, %v715
        %v717 = vadd.f32 %v713, %v716
        %vm718 = vweird.f32 %v713
        %v719 = vsel %vm718, %v713, %v717
        %v720 = vmul.f32 %v712, %v719
        %v721 = vsub.f32 %v706, %v720
        %v722 = vmul.f32 %v721, %v721
        %v723 = vsel %vm709, %v722, 0.0
        %724 = vadd.xlane.f32.xlu0 %v723
        %v725 = vpop.xlane.xlu0 %724
        %v726 = vmul.f32 %v725, %v719
        %v727 = vadd.f32 %v726, 1e-05
        %v728 = vrsqrt.pop %v727
        %v729 = vmul.f32 %v728, %v727
        %v730 = vmul.f32 %v729, %v728
        %v731 = vmul.f32 0.5, %v730
        %v732 = vsub.f32 1.5, %v731
        %v733 = vmul.f32 %v728, %v732
        %vm734 = vweird.f32 %v727
        %vm735 = vweird.f32 %v728
        %vm736 = vmor %vm734, %vm735
        %v737 = vsel %vm736, %v728, %v733
        %v738 = vmul.f32 %v721, %v737
        %v740 = vperm.slane %v707, 0
        %v742 = vmul.f32 %v738, %v740
        %v744 = vperm.slane %v708, 0
        %v746 = vadd.f32 %v742, %v744
        %v747 = vld [vmem:[%s5] sm:$0xff]
        %v748 = vld [vmem:[%s5 + $0x8] sm:$0xff]
        %v749 = vld [vmem:[%s5 + $0x10] sm:$0xff]
        %v750 = vld [vmem:[%s5 + $0x18] sm:$0xff]
        %v751 = vld [vmem:[%s6] sm:$0x1]
        %v753 = vperm.slane %v751, 0
        %v756 = vsel %vm662, %v746, 0
        %758 = vmatpush.msra.mxu0 0.0
        %759 = vmatpush.msra.mxu0 0.0
        %760 = vmatpush.msra.mxu0 0.0
        %761 = vmatpush.msra.mxu0 0.0
        %762 = vmatpush.msra.mxu0 0.0
        %763 = vmatpush.msra.mxu0 0.0
        %764 = vmatpush.msra.mxu0 0.0
        %765 = vmatpush.msra.mxu0 0.0
        %766 = vmatpush.msra.mxu0 0.0
        %767 = vmatpush.msra.mxu0 0.0
        %768 = vmatpush.msra.mxu0 0.0
        %769 = vmatpush.msra.mxu0 0.0
        %770 = vmatpush.msra.mxu0 %v750
        %771 = vmatpush.msra.mxu0 %v749
        %772 = vmatpush.msra.mxu0 %v748
        %773 = vmatpush.msra.mxu0 %v747
        %774 = vmatmul.f32.gmra.mxu0 %v756
        %v775 = vpop.f32.mrf.mxu0
        %v776 = vadd.f32 %v753, %v775
        %777 = vdwg.mxu0
        %v778 = vmul.f32 %v776, 0.35355338
        %780 = vrot.lane.b32.xlu0 %v776, 96
        %v781 = vpop.permute.xlu0 %780
        %vm782 = vcmask 64512
        %v784 = vsel %vm782, %v778, 0
        %v786 = vsel %vm782, %v781, 0
        %788 = vmatpush.xpose.msra.mxu0 0.0
        %789 = vmatpush.xpose.msra.mxu0 0.0
        %790 = vmatpush.xpose.msra.mxu0 0.0
        %791 = vmatpush.xpose.msra.mxu0 0.0
        %792 = vmatpush.xpose.msra.mxu0 0.0
        %793 = vmatpush.xpose.msra.mxu0 0.0
        %794 = vmatpush.xpose.msra.mxu0 0.0
        %795 = vmatpush.xpose.msra.mxu0 0.0
        %796 = vmatpush.xpose.msra.mxu0 0.0
        %797 = vmatpush.xpose.msra.mxu0 0.0
        %798 = vmatpush.xpose.msra.mxu0 0.0
        %799 = vmatpush.xpose.msra.mxu0 0.0
        %800 = vmatpush.xpose.msra.mxu0 0.0
        %801 = vmatpush.xpose.msra.mxu0 0.0
        %802 = vmatpush.xpose.msra.mxu0 0.0
        %803 = vmatpush.xpose.msra.mxu0 %v786
        %804 = vmatmul.f32.gmra.mxu0 %v784
        %v805 = vpop.f32.mrf.mxu0
        %v806 = vadd.f32 0.0, %v805
        %807 = vdwg.mxu0
        %vm808 = vcmask 46080
        %v809 = vsel %vm808, %v806, -inf
        %810 = vmax.xlane.f32.xlu0 %v809
        %v811 = vpop.xlane.xlu0 %810
        %v812 = vsub.f32 %v806, %v811
        %v813 = vmul.f32 %v812, 1.442695
        %v814 = vpow.pop %v813
        %v815 = vsel %vm808, %v814, 0.0
        %816 = vadd.xlane.f32.xlu0 %v815
        %v817 = vpop.xlane.xlu0 %816
        %v818 = vrcp.pop %v817
        %v819 = vmul.f32 %v814, %v818
        %820 = vrot.lane.b32.xlu0 %v776, 64
        %v821 = vpop.permute.xlu0 %820
        %vm822 = vcmask 48128
        %v824 = vsel %vm822, %v819, 0
        %vm826 = vcmask 1045504
        %v827 = vsel %vm826, %v821, 0
        %829 = vmatpush.msra.mxu0 0.0
        %830 = vmatpush.msra.mxu0 0.0
        %831 = vmatpush.msra.mxu0 0.0
        %832 = vmatpush.msra.mxu0 0.0
        %833 = vmatpush.msra.mxu0 0.0
        %834 = vmatpush.msra.mxu0 0.0
        %835 = vmatpush.msra.mxu0 0.0
        %836 = vmatpush.msra.mxu0 0.0
        %837 = vmatpush.msra.mxu0 0.0
        %838 = vmatpush.msra.mxu0 0.0
        %839 = vmatpush.msra.mxu0 0.0
        %840 = vmatpush.msra.mxu0 0.0
        %841 = vmatpush.msra.mxu0 0.0
        %842 = vmatpush.msra.mxu0 0.0
        %843 = vmatpush.msra.mxu0 0.0
        %844 = vmatpush.msra.mxu0 %v827
        %845 = vmatmul.f32.gmra.mxu0 %v824
        %v846 = vpop.f32.mrf.mxu0
        %v847 = vadd.f32 0.0, %v846
        %848 = vdwg.mxu0
        %849 = vrot.lane.b32.xlu0 %v778, 120
        %v850 = vpop.permute.xlu0 %849
        %851 = vrot.lane.b32.xlu0 %v776, 88
        %v852 = vpop.permute.xlu0 %851
        %v853 = vsel %vm782, %v850, 0
        %v855 = vsel %vm782, %v852, 0
        %857 = vmatpush.xpose.msra.mxu0 0.0
        %858 = vmatpush.xpose.msra.mxu0 0.0
        %859 = vmatpush.xpose.msra.mxu0 0.0
        %860 = vmatpush.xpose.msra.mxu0 0.0
        %861 = vmatpush.xpose.msra.mxu0 0.0
        %862 = vmatpush.xpose.msra.mxu0 0.0
        %863 = vmatpush.xpose.msra.mxu0 0.0
        %864 = vmatpush.xpose.msra.mxu0 0.0
        %865 = vmatpush.xpose.msra.mxu0 0.0
        %866 = vmatpush.xpose.msra.mxu0 0.0
        %867 = vmatpush.xpose.msra.mxu0 0.0
        %868 = vmatpush.xpose.msra.mxu0 0.0
        %869 = vmatpush.xpose.msra.mxu0 0.0
        %870 = vmatpush.xpose.msra.mxu0 0.0
        %871 = vmatpush.xpose.msra.mxu0 0.0
        %872 = vmatpush.xpose.msra.mxu0 %v855
        %873 = vmatmul.f32.gmra.mxu0 %v853
        %v874 = vpop.f32.mrf.mxu0
        %v875 = vadd.f32 0.0, %v874
        %876 = vdwg.mxu0
        %v877 = vsel %vm808, %v875, -inf
        %878 = vmax.xlane.f32.xlu0 %v877
        %v879 = vpop.xlane.xlu0 %878
        %v880 = vsub.f32 %v875, %v879
        %v881 = vmul.f32 %v880, 1.442695
        %v882 = vpow.pop %v881
        %v883 = vsel %vm808, %v882, 0.0
        %884 = vadd.xlane.f32.xlu0 %v883
        %v885 = vpop.xlane.xlu0 %884
        %v886 = vrcp.pop %v885
        %v887 = vmul.f32 %v882, %v886
        %888 = vrot.lane.b32.xlu0 %v776, 56
        %v889 = vpop.permute.xlu0 %888
        %v891 = vsel %vm822, %v887, 0
        %v893 = vsel %vm826, %v889, 0
        %895 = vmatpush.msra.mxu0 0.0
        %896 = vmatpush.msra.mxu0 0.0
        %897 = vmatpush.msra.mxu0 0.0
        %898 = vmatpush.msra.mxu0 0.0
        %899 = vmatpush.msra.mxu0 0.0
        %900 = vmatpush.msra.mxu0 0.0
        %901 = vmatpush.msra.mxu0 0.0
        %902 = vmatpush.msra.mxu0 0.0
        %903 = vmatpush.msra.mxu0 0.0
        %904 = vmatpush.msra.mxu0 0.0
        %905 = vmatpush.msra.mxu0 0.0
        %906 = vmatpush.msra.mxu0 0.0
        %907 = vmatpush.msra.mxu0 0.0
        %908 = vmatpush.msra.mxu0 0.0
        %909 = vmatpush.msra.mxu0 0.0
        %910 = vmatpush.msra.mxu0 %v893
        %911 = vmatmul.f32.gmra.mxu0 %v891
        %v912 = vpop.f32.mrf.mxu0
        %v913 = vadd.f32 0.0, %v912
        %914 = vdwg.mxu0
        %915 = vrot.lane.b32.xlu0 %v778, 112
        %v916 = vpop.permute.xlu0 %915
        %917 = vrot.lane.b32.xlu0 %v776, 80
        %v918 = vpop.permute.xlu0 %917
        %v919 = vsel %vm782, %v916, 0
        %v921 = vsel %vm782, %v918, 0
        %923 = vmatpush.xpose.msra.mxu0 0.0
        %924 = vmatpush.xpose.msra.mxu0 0.0
        %925 = vmatpush.xpose.msra.mxu0 0.0
        %926 = vmatpush.xpose.msra.mxu0 0.0
        %927 = vmatpush.xpose.msra.mxu0 0.0
        %928 = vmatpush.xpose.msra.mxu0 0.0
        %929 = vmatpush.xpose.msra.mxu0 0.0
        %930 = vmatpush.xpose.msra.mxu0 0.0
        %931 = vmatpush.xpose.msra.mxu0 0.0
        %932 = vmatpush.xpose.msra.mxu0 0.0
        %933 = vmatpush.xpose.msra.mxu0 0.0
        %934 = vmatpush.xpose.msra.mxu0 0.0
        %935 = vmatpush.xpose.msra.mxu0 0.0
        %936 = vmatpush.xpose.msra.mxu0 0.0
        %937 = vmatpush.xpose.msra.mxu0 0.0
        %938 = vmatpush.xpose.msra.mxu0 %v921
        %939 = vmatmul.f32.gmra.mxu0 %v919
        %v940 = vpop.f32.mrf.mxu0
        %v941 = vadd.f32 0.0, %v940
        %942 = vdwg.mxu0
        %v943 = vsel %vm808, %v941, -inf
        %944 = vmax.xlane.f32.xlu0 %v943
        %v945 = vpop.xlane.xlu0 %944
        %v946 = vsub.f32 %v941, %v945
        %v947 = vmul.f32 %v946, 1.442695
        %v948 = vpow.pop %v947
        %v949 = vsel %vm808, %v948, 0.0
        %950 = vadd.xlane.f32.xlu0 %v949
        %v951 = vpop.xlane.xlu0 %950
        %v952 = vrcp.pop %v951
        %v953 = vmul.f32 %v948, %v952
        %954 = vrot.lane.b32.xlu0 %v776, 48
        %v955 = vpop.permute.xlu0 %954
        %v957 = vsel %vm822, %v953, 0
        %v959 = vsel %vm826, %v955, 0
        %961 = vmatpush.msra.mxu0 0.0
        %962 = vmatpush.msra.mxu0 0.0
        %963 = vmatpush.msra.mxu0 0.0
        %964 = vmatpush.msra.mxu0 0.0
        %965 = vmatpush.msra.mxu0 0.0
        %966 = vmatpush.msra.mxu0 0.0
        %967 = vmatpush.msra.mxu0 0.0
        %968 = vmatpush.msra.mxu0 0.0
        %969 = vmatpush.msra.mxu0 0.0
        %970 = vmatpush.msra.mxu0 0.0
        %971 = vmatpush.msra.mxu0 0.0
        %972 = vmatpush.msra.mxu0 0.0
        %973 = vmatpush.msra.mxu0 0.0
        %974 = vmatpush.msra.mxu0 0.0
        %975 = vmatpush.msra.mxu0 0.0
        %976 = vmatpush.msra.mxu0 %v959
        %977 = vmatmul.f32.gmra.mxu0 %v957
        %v978 = vpop.f32.mrf.mxu0
        %v979 = vadd.f32 0.0, %v978
        %980 = vdwg.mxu0
        %981 = vrot.lane.b32.xlu0 %v778, 104
        %v982 = vpop.permute.xlu0 %981
        %983 = vrot.lane.b32.xlu0 %v776, 72
        %v984 = vpop.permute.xlu0 %983
        %v985 = vsel %vm782, %v982, 0
        %v987 = vsel %vm782, %v984, 0
        %989 = vmatpush.xpose.msra.mxu0 0.0
        %990 = vmatpush.xpose.msra.mxu0 0.0
        %991 = vmatpush.xpose.msra.mxu0 0.0
        %992 = vmatpush.xpose.msra.mxu0 0.0
        %993 = vmatpush.xpose.msra.mxu0 0.0
        %994 = vmatpush.xpose.msra.mxu0 0.0
        %995 = vmatpush.xpose.msra.mxu0 0.0
        %996 = vmatpush.xpose.msra.mxu0 0.0
        %997 = vmatpush.xpose.msra.mxu0 0.0
        %998 = vmatpush.xpose.msra.mxu0 0.0
        %999 = vmatpush.xpose.msra.mxu0 0.0
        %1000 = vmatpush.xpose.msra.mxu0 0.0
        %1001 = vmatpush.xpose.msra.mxu0 0.0
        %1002 = vmatpush.xpose.msra.mxu0 0.0
        %1003 = vmatpush.xpose.msra.mxu0 0.0
        %1004 = vmatpush.xpose.msra.mxu0 %v987
        %1005 = vmatmul.f32.gmra.mxu0 %v985
        %v1006 = vpop.f32.mrf.mxu0
        %v1007 = vadd.f32 0.0, %v1006
        %1008 = vdwg.mxu0
        %v1009 = vsel %vm808, %v1007, -inf
        %1010 = vmax.xlane.f32.xlu0 %v1009
        %v1011 = vpop.xlane.xlu0 %1010
        %v1012 = vsub.f32 %v1007, %v1011
        %v1013 = vmul.f32 %v1012, 1.442695
        %v1014 = vpow.pop %v1013
        %v1015 = vsel %vm808, %v1014, 0.0
        %1016 = vadd.xlane.f32.xlu0 %v1015
        %v1017 = vpop.xlane.xlu0 %1016
        %v1018 = vrcp.pop %v1017
        %v1019 = vmul.f32 %v1014, %v1018
        %1020 = vrot.lane.b32.xlu0 %v776, 40
        %v1021 = vpop.permute.xlu0 %1020
        %v1023 = vsel %vm822, %v1019, 0
        %v1025 = vsel %vm826, %v1021, 0
        %1027 = vmatpush.msra.mxu0 0.0
        %1028 = vmatpush.msra.mxu0 0.0
        %1029 = vmatpush.msra.mxu0 0.0
        %1030 = vmatpush.msra.mxu0 0.0
        %1031 = vmatpush.msra.mxu0 0.0
        %1032 = vmatpush.msra.mxu0 0.0
        %1033 = vmatpush.msra.mxu0 0.0
        %1034 = vmatpush.msra.mxu0 0.0
        %1035 = vmatpush.msra.mxu0 0.0
        %1036 = vmatpush.msra.mxu0 0.0
        %1037 = vmatpush.msra.mxu0 0.0
        %1038 = vmatpush.msra.mxu0 0.0
        %1039 = vmatpush.msra.mxu0 0.0
        %1040 = vmatpush.msra.mxu0 0.0
        %1041 = vmatpush.msra.mxu0 0.0
        %1042 = vmatpush.msra.mxu0 %v1025
        %1043 = vmatmul.f32.gmra.mxu0 %v1023
        %v1044 = vpop.f32.mrf.mxu0
        %v1045 = vadd.f32 0.0, %v1044
        %1046 = vdwg.mxu0
        %1048 = vrot.lane.b32.xlu0 %v913, 8
        %v1049 = vpop.permute.xlu0 %1048
        %1052 = vrot.lane.b32.xlu0 %v979, 16
        %v1053 = vpop.permute.xlu0 %1052
        %1056 = vrot.lane.b32.xlu0 %v1045, 24
        %v1057 = vpop.permute.xlu0 %1056
        %v1059 = vsel %vm782, %v847, %v1049
        %vm1060 = vcmask 130048
        %v1061 = vsel %vm1060, %v1059, %v1053
        %vm1062 = vcmask 195584
        %v1063 = vsel %vm1062, %v1061, %v1057
        %v1064 = vld [vmem:[%s7] sm:$0xff]
        %v1065 = vld [vmem:[%s7 + $0x8] sm:$0xff]
        %v1066 = vld [vmem:[%s7 + $0x10] sm:$0xff]
        %v1067 = vld [vmem:[%s7 + $0x18] sm:$0xff]
        %v1068 = vld [vmem:[%s8] sm:$0x1]
        %v1070 = vperm.slane %v1068, 0
        %v1073 = vsel %vm662, %v1063, 0
        %1075 = vmatpush.msra.mxu0 0.0
        %1076 = vmatpush.msra.mxu0 0.0
        %1077 = vmatpush.msra.mxu0 0.0
        %1078 = vmatpush.msra.mxu0 0.0
        %1079 = vmatpush.msra.mxu0 0.0
        %1080 = vmatpush.msra.mxu0 0.0
        %1081 = vmatpush.msra.mxu0 0.0
        %1082 = vmatpush.msra.mxu0 0.0
        %1083 = vmatpush.msra.mxu0 0.0
        %1084 = vmatpush.msra.mxu0 0.0
        %1085 = vmatpush.msra.mxu0 0.0
        %1086 = vmatpush.msra.mxu0 0.0
        %1087 = vmatpush.msra.mxu0 %v1067
        %1088 = vmatpush.msra.mxu0 %v1066
        %1089 = vmatpush.msra.mxu0 %v1065
        %1090 = vmatpush.msra.mxu0 %v1064
        %1091 = vmatmul.f32.gmra.mxu0 %v1073
        %v1092 = vpop.f32.mrf.mxu0
        %v1093 = vadd.f32 %v1070, %v1092
        %1094 = vdwg.mxu0
        %v1095 = vadd.f32 %v746, %v1093
        %v1096 = vld [vmem:[%s9] sm:$0x1]
        %v1097 = vld [vmem:[%s10] sm:$0x1]
        %v1098 = vsel %vm709, %v1095, 0.0
        %1099 = vadd.xlane.f32.xlu0 %v1098
        %v1100 = vpop.xlane.xlu0 %1099
        %v1101 = vmul.f32 %v1100, %v719
        %v1102 = vsub.f32 %v1095, %v1101
        %v1103 = vmul.f32 %v1102, %v1102
        %v1104 = vsel %vm709, %v1103, 0.0
        %1105 = vadd.xlane.f32.xlu0 %v1104
        %v1106 = vpop.xlane.xlu0 %1105
        %v1107 = vmul.f32 %v1106, %v719
        %v1108 = vadd.f32 %v1107, 1e-05
        %v1109 = vrsqrt.pop %v1108
        %v1110 = vmul.f32 %v1109, %v1108
        %v1111 = vmul.f32 %v1110, %v1109
        %v1112 = vmul.f32 0.5, %v1111
        %v1113 = vsub.f32 1.5, %v1112
        %v1114 = vmul.f32 %v1109, %v1113
        %vm1115 = vweird.f32 %v1108
        %vm1116 = vweird.f32 %v1109
        %vm1117 = vmor %vm1115, %vm1116
        %v1118 = vsel %vm1117, %v1109, %v1114
        %v1119 = vmul.f32 %v1102, %v1118
        %v1121 = vperm.slane %v1096, 0
        %v1123 = vmul.f32 %v1119, %v1121
        %v1125 = vperm.slane %v1097, 0
        %v1127 = vadd.f32 %v1123, %v1125
        %v1128 = vld [vmem:[%s11] sm:$0xff]
        %v1129 = vld [vmem:[%s11 + $0x8] sm:$0xff]
        %v1130 = vld [vmem:[%s11 + $0x10] sm:$0xff]
        %v1131 = vld [vmem:[%s11 + $0x18] sm:$0xff]
        %v1132 = vld [vmem:[%s12] sm:$0x1]
        %v1134 = vperm.slane %v1132, 0
        %v1137 = vsel %vm662, %v1127, 0
        %1139 = vmatpush.msra.mxu0 0.0
        %1140 = vmatpush.msra.mxu0 0.0
        %1141 = vmatpush.msra.mxu0 0.0
        %1142 = vmatpush.msra.mxu0 0.0
        %1143 = vmatpush.msra.mxu0 0.0
        %1144 = vmatpush.msra.mxu0 0.0
        %1145 = vmatpush.msra.mxu0 0.0
        %1146 = vmatpush.msra.mxu0 0.0
        %1147 = vmatpush.msra.mxu0 0.0
        %1148 = vmatpush.msra.mxu0 0.0
        %1149 = vmatpush.msra.mxu0 0.0
        %1150 = vmatpush.msra.mxu0 0.0
        %1151 = vmatpush.msra.mxu0 %v1131
        %1152 = vmatpush.msra.mxu0 %v1130
        %1153 = vmatpush.msra.mxu0 %v1129
        %1154 = vmatpush.msra.mxu0 %v1128
        %1155 = vmatmul.f32.gmra.mxu0 %v1137
        %v1156 = vpop.f32.mrf.mxu0
        %v1157 = vadd.f32 %v1134, %v1156
        %1158 = vdwg.mxu0
        %v1159 = vmax.f32 %v1157, 0.0
        %v1160 = vld [vmem:[%s13] sm:$0xff]
        %v1161 = vld [vmem:[%s13 + $0x8] sm:$0xff]
        %v1162 = vld [vmem:[%s13 + $0x10] sm:$0xff]
        %v1163 = vld [vmem:[%s13 + $0x18] sm:$0xff]
        %v1164 = vld [vmem:[%s13 + $0x20] sm:$0xff]
        %v1165 = vld [vmem:[%s13 + $0x28] sm:$0xff]
        %v1166 = vld [vmem:[%s13 + $0x30] sm:$0xff]
        %v1167 = vld [vmem:[%s13 + $0x38] sm:$0xff]
        %v1168 = vld [vmem:[%s14] sm:$0x1]
        %v1170 = vperm.slane %v1168, 0
        %v1173 = vsel %vm664, %v1159, 0
        %1175 = vmatpush.msra.mxu0 0.0
        %1176 = vmatpush.msra.mxu0 0.0
        %1177 = vmatpush.msra.mxu0 0.0
        %1178 = vmatpush.msra.mxu0 0.0
        %1179 = vmatpush.msra.mxu0 0.0
        %1180 = vmatpush.msra.mxu0 0.0
        %1181 = vmatpush.msra.mxu0 0.0
        %1182 = vmatpush.msra.mxu0 0.0
        %1183 = vmatpush.msra.mxu0 %v1167
        %1184 = vmatpush.msra.mxu0 %v1166
        %1185 = vmatpush.msra.mxu0 %v1165
        %1186 = vmatpush.msra.mxu0 %v1164
        %1187 = vmatpush.msra.mxu0 %v1163
        %1188 = vmatpush.msra.mxu0 %v1162
        %1189 = vmatpush.msra.mxu0 %v1161
        %1190 = vmatpush.msra.mxu0 %v1160
        %1191 = vmatmul.f32.gmra.mxu0 %v1173
        %v1192 = vpop.f32.mrf.mxu0
        %v1193 = vadd.f32 %v1170, %v1192
        %1194 = vdwg.mxu0
        %v1195 = vadd.f32 %v1127, %v1193
        %v1196 = vld [vmem:[%s15] sm:$0x1]
        %v1197 = vld [vmem:[%s16] sm:$0x1]
        %v1198 = vsel %vm709, %v1195, 0.0
        %1199 = vadd.xlane.f32.xlu0 %v1198
        %v1200 = vpop.xlane.xlu0 %1199
        %v1201 = vmul.f32 %v1200, %v719
        %v1202 = vsub.f32 %v1195, %v1201
        %v1203 = vmul.f32 %v1202, %v1202
        %v1204 = vsel %vm709, %v1203, 0.0
        %1205 = vadd.xlane.f32.xlu0 %v1204
        %v1206 = vpop.xlane.xlu0 %1205
        %v1207 = vmul.f32 %v1206, %v719
        %v1208 = vadd.f32 %v1207, 1e-05
        %v1209 = vrsqrt.pop %v1208
        %v1210 = vmul.f32 %v1209, %v1208
        %v1211 = vmul.f32 %v1210, %v1209
        %v1212 = vmul.f32 0.5, %v1211
        %v1213 = vsub.f32 1.5, %v1212
        %v1214 = vmul.f32 %v1209, %v1213
        %vm1215 = vweird.f32 %v1208
        %vm1216 = vweird.f32 %v1209
        %vm1217 = vmor %vm1215, %vm1216
        %v1218 = vsel %vm1217, %v1209, %v1214
        %v1219 = vmul.f32 %v1202, %v1218
        %v1221 = vperm.slane %v1196, 0
        %v1223 = vmul.f32 %v1219, %v1221
        %v1225 = vperm.slane %v1197, 0
        %v1227 = vadd.f32 %v1223, %v1225
        %v1228 = vld [vmem:[%s17] sm:$0xff]
        %v1229 = vld [vmem:[%s17 + $0x8] sm:$0xff]
        %v1230 = vld [vmem:[%s17 + $0x10] sm:$0xff]
        %v1231 = vld [vmem:[%s17 + $0x18] sm:$0xff]
        %v1232 = vld [vmem:[%s17 + $0x20] sm:$0xff]
        %v1233 = vld [vmem:[%s17 + $0x28] sm:$0xff]
        %v1234 = vld [vmem:[%s17 + $0x30] sm:$0xff]
        %v1235 = vld [vmem:[%s17 + $0x38] sm:$0xff]
        %v1236 = vld [vmem:[%s17 + $0x40] sm:$0xff]
        %v1237 = vld [vmem:[%s17 + $0x48] sm:$0xff]
        %v1238 = vld [vmem:[%s17 + $0x50] sm:$0xff]
        %v1239 = vld [vmem:[%s17 + $0x58] sm:$0xff]
        %v1240 = vld [vmem:[%s18] sm:$0x1]
        %v1242 = vperm.slane %v1240, 0
        %v1244 = vadd.f32 %v1242, 0.0
        %v1246 = vrot.slane %v1227, 6
        %vm1248 = vcmask 1041408
        %v1249 = vsel %vm1248, 0.0, %v1246
        %v1251 = vsel %vm662, %v1249, 0
        %1253 = vmatpush.msra.mxu0 0.0
        %1254 = vmatpush.msra.mxu0 0.0
        %1255 = vmatpush.msra.mxu0 0.0
        %1256 = vmatpush.msra.mxu0 0.0
        %1257 = vmatpush.msra.mxu0 0.0
        %1258 = vmatpush.msra.mxu0 0.0
        %1259 = vmatpush.msra.mxu0 0.0
        %1260 = vmatpush.msra.mxu0 0.0
        %1261 = vmatpush.msra.mxu0 0.0
        %1262 = vmatpush.msra.mxu0 0.0
        %1263 = vmatpush.msra.mxu0 0.0
        %1264 = vmatpush.msra.mxu0 0.0
        %1265 = vmatpush.msra.mxu0 %v1231
        %1266 = vmatpush.msra.mxu0 %v1230
        %1267 = vmatpush.msra.mxu0 %v1229
        %1268 = vmatpush.msra.mxu0 %v1228
        %1269 = vmatmul.f32.gmra.mxu0 %v1251
        %v1270 = vpop.f32.mrf.mxu0
        %v1271 = vadd.f32 0.0, %v1270
        %1272 = vdwg.mxu0
        %v1273 = vadd.f32 %v1244, %v1271
        %vm1275 = vcmask 1046528
        %v1276 = vrot.slane %v1249, 1
        %v1277 = vrot.slane 0.0, 1
        %v1278 = vsel %vm1275, %v1276, %v1277
        %v1279 = vsel %vm662, %v1278, 0
        %1281 = vmatpush.msra.mxu0 0.0
        %1282 = vmatpush.msra.mxu0 0.0
        %1283 = vmatpush.msra.mxu0 0.0
        %1284 = vmatpush.msra.mxu0 0.0
        %1285 = vmatpush.msra.mxu0 0.0
        %1286 = vmatpush.msra.mxu0 0.0
        %1287 = vmatpush.msra.mxu0 0.0
        %1288 = vmatpush.msra.mxu0 0.0
        %1289 = vmatpush.msra.mxu0 0.0
        %1290 = vmatpush.msra.mxu0 0.0
        %1291 = vmatpush.msra.mxu0 0.0
        %1292 = vmatpush.msra.mxu0 0.0
        %1293 = vmatpush.msra.mxu0 %v1235
        %1294 = vmatpush.msra.mxu0 %v1234
        %1295 = vmatpush.msra.mxu0 %v1233
        %1296 = vmatpush.msra.mxu0 %v1232
        %1297 = vmatmul.f32.gmra.mxu0 %v1279
        %v1298 = vpop.f32.mrf.mxu0
        %v1299 = vadd.f32 0.0, %v1298
        %1300 = vdwg.mxu0
        %v1301 = vadd.f32 %v1273, %v1299
        %v1302 = vrot.slane %v1249, 2
        %v1303 = vrot.slane 0.0, 2
        %v1304 = vsel %vm826, %v1302, %v1303
        %v1305 = vsel %vm662, %v1304, 0
        %1307 = vmatpush.msra.mxu0 0.0
        %1308 = vmatpush.msra.mxu0 0.0
        %1309 = vmatpush.msra.mxu0 0.0
        %1310 = vmatpush.msra.mxu0 0.0
        %1311 = vmatpush.msra.mxu0 0.0
        %1312 = vmatpush.msra.mxu0 0.0
        %1313 = vmatpush.msra.mxu0 0.0
        %1314 = vmatpush.msra.mxu0 0.0
        %1315 = vmatpush.msra.mxu0 0.0
        %1316 = vmatpush.msra.mxu0 0.0
        %1317 = vmatpush.msra.mxu0 0.0
        %1318 = vmatpush.msra.mxu0 0.0
        %1319 = vmatpush.msra.mxu0 %v1239
        %1320 = vmatpush.msra.mxu0 %v1238
        %1321 = vmatpush.msra.mxu0 %v1237
        %1322 = vmatpush.msra.mxu0 %v1236
        %1323 = vmatmul.f32.gmra.mxu0 %v1305
        %v1324 = vpop.f32.mrf.mxu0
        %v1325 = vadd.f32 0.0, %v1324
        %1326 = vdwg.mxu0
        %v1327 = vadd.f32 %v1301, %v1325
        %v1328 = vmax.f32 %v1327, 0.0
        %v1329 = vld [vmem:[%s19] sm:$0x1]
        %v1330 = vld [vmem:[%s20] sm:$0x1]
        %v1331 = vsel %vm662, %v1328, 0.0
        %1332 = vadd.xlane.f32.xlu0 %v1331
        %v1333 = vpop.xlane.xlu0 %1332
        %v1334 = vmul.f32 %v1333, %v719
        %v1335 = vsub.f32 %v1328, %v1334
        %v1336 = vmul.f32 %v1335, %v1335
        %v1337 = vsel %vm662, %v1336, 0.0
        %1338 = vadd.xlane.f32.xlu0 %v1337
        %v1339 = vpop.xlane.xlu0 %1338
        %v1340 = vmul.f32 %v1339, %v719
        %v1341 = vadd.f32 %v1340, 1e-05
        %v1342 = vrsqrt.pop %v1341
        %v1343 = vmul.f32 %v1342, %v1341
        %v1344 = vmul.f32 %v1343, %v1342
        %v1345 = vmul.f32 0.5, %v1344
        %v1346 = vsub.f32 1.5, %v1345
        %v1347 = vmul.f32 %v1342, %v1346
        %vm1348 = vweird.f32 %v1341
        %vm1349 = vweird.f32 %v1342
        %vm1350 = vmor %vm1348, %vm1349
        %v1351 = vsel %vm1350, %v1342, %v1347
        %v1352 = vmul.f32 %v1335, %v1351
        %v1354 = vperm.slane %v1329, 0
        %v1356 = vmul.f32 %v1352, %v1354
        %v1358 = vperm.slane %v1330, 0
        %v1360 = vadd.f32 %v1356, %v1358
        %v1361 = vadd.f32 %v652, %v1360
        %1362 = vst.msk [vmem:[%s647] sm:$0xff] %vm662, %v1361
        %s1363 = sand.u32 %s489, 1
        %s1364 = scalar_lea.sflag [#allocation3], %s1363
        %s1365 = sand.u32 %s489, 1
        %s1366 = smul.addr %s1365, 8
        %s1367 = scalar_lea.vmem [#allocation2], %s1366
        // Predicated region
        $region105: #{tpu_custom_call.1} parent=103 // pred_check
          %p1368 = pneg %p499
        $region106: #{tpu_custom_call.1} parent=103 // pred_check_branch
          %1370 = sbr.rel (%p1368) target = $region108
        $region107: #{tpu_custom_call.1} parent=103 // pred_region
          %1372 = vsyncadd %s1364, 0
          %s1373 = smul.addr %s35, 8
          %s1374 = scalar_lea.hbm %s21, %s1373
          %s1376 = sshll.u32 %s1367, 4
          %s1377 = int_to_ptr.vmem [resolvable:$true] %s1376
          %s1378 = sshll.u32 %s1374, 4
          %s1379 = int_to_ptr.hbm [resolvable:$true] %s1378
          %1381 = dma.vmem_to_hbm [thread:$0]  %s1377, 128, %s1379, %s1364
        $region108: #{tpu_custom_call.1} parent=103 // pred_fallthru
          _
      $region104: #{tpu_custom_call.1} parent=5 // pred_fallthru
        _
      %p1382 = scmp.le.s32.totalorder 2, %s30
      // Predicated region
      $region109: #{tpu_custom_call.1} parent=5 // pred_check
        %p1383 = pneg %p1382
      $region110: #{tpu_custom_call.1} parent=5 // pred_check_branch
        %1385 = sbr.rel (%p1383) target = $region112
      $region111: #{tpu_custom_call.1} parent=5 // pred_region
        %s1386 = ssub.s32 %s30, 2
        // Predicated region
        $region113: #{tpu_custom_call.1} parent=111 // pred_check
          %p1387 = pneg %p505
        $region114: #{tpu_custom_call.1} parent=111 // pred_check_branch
          %1389 = sbr.rel (%p1387) target = $region116
        $region115: #{tpu_custom_call.1} parent=111 // pred_region
          %s1390 = sand.u32 %s490, 1
          %s1391 = scalar_lea.sflag [#allocation3], %s1390
          %s1392 = sand.u32 %s490, 1
          %s1393 = smul.addr %s1392, 8
          %s1394 = scalar_lea.vmem [#allocation2], %s1393
          %1396 = dma.done %s1391, 128
        $region116: #{tpu_custom_call.1} parent=111 // pred_fallthru
          _
      $region112: #{tpu_custom_call.1} parent=5 // pred_fallthru
        _
    $region6: #{tpu_custom_call.1} parent=1 // loop_footer
      %s34 = sadd.s32 1, %s30
    $region7: #{tpu_custom_call.1} parent=1 // loop_footer_branch
      %29 = sbr.rel target = $region3
    $region8: #{tpu_custom_call.1} parent=1 // loop_exit
      _
    %1397 = vsyncpa [#allocation3], 1
    %s1398 = scalar_lea.sflag [#allocation3], 1
    %1399 = vsyncpa %s1398, 1

</llo_original>
